<compile_context>
chip_gen: v6e
topology: v6e:2x2x1
jax: 0.10.0
libtpu: 0.0.40
codegen_flags: <defaults>
</compile_context>

<pallas_src>
import functools

import jax
import jax.numpy as jnp
from jax import lax
from jax.experimental import pallas as pl
from jax.experimental.pallas import tpu as pltpu

BN_EPS = 1e-5
EXPANSION = 4  # Bottleneck expansion


def _round_up(x, m):
    return (x + m - 1) // m * m


# ----------------------------------------------------------------------------
# Pallas kernels: tiled matmul with fused scale/bias/(residual)/ReLU epilogue
# ----------------------------------------------------------------------------
def _mm_kernel(a_ref, w_ref, s_ref, b_ref, o_ref, acc_ref, *, relu):
    """acc += a @ w over the k grid axis; epilogue: out = act(acc*scale+bias)."""
    @pl.when(pl.program_id(2) == 0)
    def _():
        acc_ref[...] = jnp.zeros_like(acc_ref)

    acc_ref[...] += jnp.dot(a_ref[...], w_ref[...],
                            preferred_element_type=jnp.float32)

    @pl.when(pl.program_id(2) == pl.num_programs(2) - 1)
    def _():
        y = acc_ref[...] * s_ref[...] + b_ref[...]
        if relu:
            y = jnp.maximum(y, 0.0)
        o_ref[...] = y.astype(o_ref.dtype)


def _mm_res_kernel(a_ref, w_ref, s_ref, b_ref, r_ref, o_ref, acc_ref, *, relu):
    """Same as _mm_kernel but with the bottleneck residual fused: act(acc*s+b+res)."""
    @pl.when(pl.program_id(2) == 0)
    def _():
        acc_ref[...] = jnp.zeros_like(acc_ref)

    acc_ref[...] += jnp.dot(a_ref[...], w_ref[...],
                            preferred_element_type=jnp.float32)

    @pl.when(pl.program_id(2) == pl.num_programs(2) - 1)
    def _():
        y = acc_ref[...] * s_ref[...] + b_ref[...] + r_ref[...]
        if relu:
            y = jnp.maximum(y, 0.0)
        o_ref[...] = y.astype(o_ref.dtype)


def _pick_tm(M):
    Mr = _round_up(M, 8)
    if Mr <= 512:
        return Mr
    for c in (512, 256, 128):
        if Mr % c == 0:
            return c
    return 128  # bounded padding waste (< 128 rows)


def _pick_tiles(M, Kr, Nr):
    """Adaptive tiles. Kr/Nr are already multiples of 128."""
    # K tile: largest multiple of 128 dividing Kr, capped at 512 -> Kp == Kr,
    # so padded-K waste is always < 128 (previously up to ~78% for K=576).
    kb = Kr // 128
    TK = 128
    for t in (4, 3, 2):
        if kb % t == 0:
            TK = 128 * t
            break
    TM = _pick_tm(M)
    if Nr >= 512 and Nr % 512 == 0:
        TN = 512
    elif Nr % 256 == 0:
        TN = 256
    else:
        TN = 128
    # Guarantee >= 2 parallel output blocks when possible so both v7x
    # TensorCores / megacore halves get work.
    Mp = _round_up(M, TM)
    if (Mp // TM) * (Nr // TN) < 2:
        if Nr // 128 >= 2:
            TN = 128
        elif TM % 16 == 0:
            TM = TM // 2
    return TM, TN, TK


def _matmul_fused(a, w, scale, bias, res, relu):
    """out = act((a @ w) * scale + bias [+ res]).

    a: (M, Kr) bf16, w: (Kr, Nr) bf16, scale/bias: (1, Nr) f32,
    res: (M, Nr) f32 or None.  Returns (Mp, Nr) f32.
    """
    M, Kr = a.shape
    Kr2, Nr = w.shape
    assert Kr == Kr2
    TM, TN, TK = _pick_tiles(M, Kr, Nr)
    Mp = _round_up(M, TM)
    if Mp > M:
        a = jnp.pad(a, ((0, Mp - M), (0, 0)))

    in_specs = [
        pl.BlockSpec((TM, TK), lambda i, j, k: (i, k)),
        pl.BlockSpec((TK, TN), lambda i, j, k: (k, j)),
        pl.BlockSpec((1, TN), lambda i, j, k: (0, j)),
        pl.BlockSpec((1, TN), lambda i, j, k: (0, j)),
    ]
    args = [a, w, scale, bias]
    if res is not None:
        if Mp > M:
            res = jnp.pad(res, ((0, Mp - M), (0, 0)))
        in_specs.append(pl.BlockSpec((TM, TN), lambda i, j, k: (i, j)))
        args.append(res)
        kern = functools.partial(_mm_res_kernel, relu=relu)
    else:
        kern = functools.partial(_mm_kernel, relu=relu)

    return pl.pallas_call(
        kern,
        out_shape=jax.ShapeDtypeStruct((Mp, Nr), jnp.float32),
        grid_spec=pltpu.PrefetchScalarGridSpec(
            num_scalar_prefetch=0,
            grid=(Mp // TM, Nr // TN, Kr // TK),
            in_specs=in_specs,
            out_specs=pl.BlockSpec((TM, TN), lambda i, j, k: (i, j)),
            scratch_shapes=[pltpu.VMEM((TM, TN), jnp.float32)],
        ),
        compiler_params=pltpu.CompilerParams(
            dimension_semantics=("parallel", "parallel", "arbitrary")),
    )(*args)


# ----------------------------------------------------------------------------
# Convolution wrapper: im2col (bf16, single padded write) + Pallas matmul,
# all inside one jit per conv so the glue doesn't dispatch op-by-op.
# ----------------------------------------------------------------------------
@functools.partial(jax.jit,
                   static_argnames=("kh", "kw", "cout", "stride", "padding",
                                    "dilation", "relu"))
def _conv_impl(x, w, scale, bias, res, *, kh, kw, cout, stride, padding,
               dilation, relu):
    N, H, W, cin = x.shape
    Kr, Nr = w.shape
    Ho = (H + 2 * padding - dilation * (kh - 1) - 1) // stride + 1
    Wo = (W + 2 * padding - dilation * (kw - 1) - 1) // stride + 1
    M = N * Ho * Wo
    K = kh * kw * cin
    pad_k = Kr - K

    xb = x.astype(jnp.bfloat16)  # bf16 MXU operands; halves im2col HBM traffic
    if padding:
        xb = jnp.pad(xb, ((0, 0), (padding, padding), (padding, padding), (0, 0)))

    if kh == 1 and kw == 1 and stride == 1 and pad_k == 0:
        a = xb.reshape(M, Kr)  # 1x1 conv: no im2col copy at all
    else:
        # TODO(synk): the KH*KW taps are still materialized (im2col) in HBM;
        # a manual-DMA direct-conv kernel would remove this remaining blow-up.
        cols = []
        for i in range(kh):
            for j in range(kw):
                h0, w0 = i * dilation, j * dilation
                cols.append(lax.slice(
                    xb, (0, h0, w0, 0),
                    (N, h0 + (Ho - 1) * stride + 1,
                     w0 + (Wo - 1) * stride + 1, cin),
                    (1, stride, stride, 1)))
        if pad_k:  # K padding folded into the single im2col write
            cols.append(jnp.zeros((N, Ho, Wo, pad_k), jnp.bfloat16))
        a = cols[0] if len(cols) == 1 else jnp.concatenate(cols, axis=-1)
        a = a.reshape(M, Kr)

    res2 = None
    if res is not None:
        res2 = res.reshape(M, cout).astype(jnp.float32)
        if Nr > cout:
            res2 = jnp.pad(res2, ((0, 0), (0, Nr - cout)))

    out = _matmul_fused(a, w, scale, bias, res2, relu)
    return out[:M, :cout].reshape(N, Ho, Wo, cout)


def conv_bn_act(x, cp, *, stride=1, padding=0, dilation=1, relu=False, res=None):
    """Conv2d (+bias) folded with eval-mode BN, ReLU and optional residual."""
    return _conv_impl(x, cp["w"], cp["scale"], cp["bias"], res,
                      kh=cp["kh"], kw=cp["kw"], cout=cp["cout"],
                      stride=stride, padding=padding, dilation=dilation,
                      relu=relu)


# ----------------------------------------------------------------------------
# Plain-JAX glue ops (negligible cost vs. the convolutions)
# ----------------------------------------------------------------------------
def maxpool_3x3_s2_p1(x):
    # TODO(synk): self.maxpool is referenced in forward() but never defined in
    # __init__; we use the standard ResNet MaxPool2d(3, stride=2, padding=1).
    return lax.reduce_window(x, -jnp.inf, lax.max,
                             (1, 3, 3, 1), (1, 2, 2, 1),
                             [(0, 0), (1, 1), (1, 1), (0, 0)])


def adaptive_avg_pool(x, s):
    """PyTorch AdaptiveAvgPool2d(s) semantics on NHWC input."""
    N, H, W, C = x.shape
    rows = []
    for i in range(s):
        h0, h1 = (i * H) // s, -(-((i + 1) * H) // s)
        cols = []
        for j in range(s):
            w0, w1 = (j * W) // s, -(-((j + 1) * W) // s)
            cols.append(jnp.mean(x[:, h0:h1, w0:w1, :], axis=(1, 2)))
        rows.append(jnp.stack(cols, axis=1))
    return jnp.stack(rows, axis=1)


def bilinear_resize(x, H, W):
    # matches F.interpolate(mode='bilinear', align_corners=False)
    N, _, _, C = x.shape
    return jax.image.resize(x, (N, H, W, C), method="bilinear")


# ----------------------------------------------------------------------------
# Parameter construction (deterministic, mirrors the PyTorch init loop:
# every Conv2d weight ~ N(0, 0.001), every BN gamma ~ N(1, 0.02), beta = 0)
# ----------------------------------------------------------------------------
class PGen:
    def __init__(self, key):
        self._key = key

    def normal(self, shape, std):
        self._key, sub = jax.random.split(self._key)
        return (std * jax.random.normal(sub, shape)).astype(jnp.float32)


def conv_p(gen, kh, kw, cin, cout, bias=False, bn=False):
    p = {"w": gen.normal((kh, kw, cin, cout), 0.001)}
    if bias:
        p["b"] = jnp.zeros((cout,), jnp.float32)
    if bn:
        p["gamma"] = 1.0 + gen.normal((cout,), 0.02)
        p["beta"] = jnp.zeros((cout,), jnp.float32)
    return p


def bottleneck_p(gen, inplanes, planes, stride, dilation, downsample):
    # TODO(synk): `block` is not defined in the reference; standard torchvision
    # Bottleneck (1x1 -> 3x3(dilated) -> 1x1, expansion 4) is used.
    p = {
        "conv1": conv_p(gen, 1, 1, inplanes, planes, bn=True),
        "conv2": conv_p(gen, 3, 3, planes, planes, bn=True),
        "conv3": conv_p(gen, 1, 1, planes, planes * EXPANSION, bn=True),
        "stride": stride,
        "dilation": dilation,
    }
    if downsample:
        p["ds"] = conv_p(gen, 1, 1, inplanes, planes * EXPANSION, bn=True)
    return p


def make_layer_p(gen, state, planes, blocks, stride=1, dilation=1):
    inplanes = state["inplanes"]
    downsample = (stride != 1 or inplanes != planes * EXPANSION
                  or dilation == 2 or dilation == 4)
    blocks_p = [bottleneck_p(gen, inplanes, planes, stride, dilation, downsample)]
    inplanes = planes * EXPANSION
    for _ in range(1, blocks):
        blocks_p.append(bottleneck_p(gen, inplanes, planes, 1, dilation, False))
    state["inplanes"] = inplanes
    return blocks_p


def aspp_p(gen, inplanes, dilation_series, padding_series, num_classes):
    return {
        "convs": [conv_p(gen, 3, 3, inplanes, num_classes, bias=True)
                  for _ in dilation_series],
        "dil": list(dilation_series),
        "pad": list(padding_series),
    }


def psp_p(gen, inplanes, pool_series, num_classes):
    return {
        "pool_series": list(pool_series),
        "psp": [conv_p(gen, 1, 1, inplanes, 512, bn=True) for _ in pool_series],
        "conv_last1": conv_p(gen, 3, 3, inplanes + len(pool_series) * 512, 512, bn=True),
        "conv_last2": conv_p(gen, 1, 1, 512, num_classes, bias=True),
    }


def mulrefnet_params(key, layers, num_classes):
    gen = PGen(key)
    p = {}
    p["conv1"] = conv_p(gen, 3, 3, 3, 64, bn=True)
    p["conv2"] = conv_p(gen, 3, 3, 64, 64, bn=True)
    p["conv3"] = conv_p(gen, 3, 3, 64, 64, bn=True)
    state = {"inplanes": 64}
    p["layer1"] = make_layer_p(gen, state, 64, layers[0])
    p["layer2"] = make_layer_p(gen, state, 128, layers[1], stride=2)
    p["layer3"] = make_layer_p(gen, state, 256, layers[2], stride=1, dilation=2)
    p["layer4"] = make_layer_p(gen, state, 512, layers[3], stride=1, dilation=4)
    # inplanes fixed to match the tensors they are actually applied to:
    p["layer5"] = aspp_p(gen, 1024, [6, 12, 18, 24], [6, 12, 18, 24], num_classes)  # on x0
    p["layer6"] = psp_p(gen, 2048, [1, 2, 3, 6], num_classes)                        # on x0_
    p["conv1x1_l2"] = conv_p(gen, 3, 3, 512, num_classes, bn=True)
    p["conv1x1_l3"] = conv_p(gen, 3, 3, 1024, num_classes, bias=True, bn=True)
    p["conv_oneplus1"] = conv_p(gen, 3, 3, num_classes * 3, 2048, bn=True)
    p["conv_oneplus2"] = conv_p(gen, 1, 1, 2048, num_classes, bias=True)
    return p


# ----------------------------------------------------------------------------
# One-time parameter prep: fold eval-mode BN, flatten HWIO -> (K, Cout),
# pad K/N to multiples of 128, cast weights to bf16.
# ----------------------------------------------------------------------------
def _prepare_conv(p):
    w = p["w"]
    KH, KW, Cin, Cout = w.shape
    cb = p.get("b", None)
    if "gamma" in p:
        # running_mean=0, running_var=1 (freshly initialized eval-mode BN)
        scale = p["gamma"] / jnp.sqrt(1.0 + BN_EPS)
        bias = p["beta"] + (cb * scale if cb is not None else 0.0)
    else:
        scale = jnp.ones((Cout,), jnp.float32)
        bias = cb if cb is not None else jnp.zeros((Cout,), jnp.float32)
    K = KH * KW * Cin
    Kr, Nr = _round_up(K, 128), _round_up(Cout, 128)
    wm = jnp.pad(w.reshape(K, Cout), ((0, Kr - K), (0, Nr - Cout)))
    return {
        "w": wm.astype(jnp.bfloat16),
        "scale": jnp.pad(scale.reshape(1, Cout),
                         ((0, 0), (0, Nr - Cout))).astype(jnp.float32),
        "bias": jnp.pad(bias.reshape(1, Cout),
                        ((0, 0), (0, Nr - Cout))).astype(jnp.float32),
        "kh": int(KH), "kw": int(KW), "cin": int(Cin), "cout": int(Cout),
    }


def prepare_params(p):
    if isinstance(p, dict):
        if "w" in p:
            return _prepare_conv(p)
        return {k: prepare_params(v) for k, v in p.items()}
    if isinstance(p, list):
        return [prepare_params(v) for v in p]
    return p


# ----------------------------------------------------------------------------
# Forward passes
# ----------------------------------------------------------------------------
def bottleneck_fwd(x, p):
    out = conv_bn_act(x, p["conv1"], relu=True)
    out = conv_bn_act(out, p["conv2"], stride=p["stride"],
                      padding=p["dilation"], dilation=p["dilation"], relu=True)
    if "ds" in p:
        identity = conv_bn_act(x, p["ds"], stride=p["stride"], relu=False)
    else:
        identity = x
    # residual add + ReLU fused into conv3's matmul epilogue
    return conv_bn_act(out, p["conv3"], relu=True, res=identity)


def layer_fwd(x, blocks_p):
    for p in blocks_p:
        x = bottleneck_fwd(x, p)
    return x


def aspp_fwd(x, p):
    # Reproduces the reference bug: `return` inside the loop -> only branches
    # 0 and 1 are summed.
    out = conv_bn_act(x, p["convs"][0], padding=p["pad"][0], dilation=p["dil"][0])
    for i in range(len(p["convs"]) - 1):
        out = out + conv_bn_act(x, p["convs"][i + 1],
                                padding=p["pad"][i + 1], dilation=p["dil"][i + 1])
        return out


def psp_fwd(x, p):
    N, H, W, C = x.shape
    outs = [x]
    for scale, cp in zip(p["pool_series"], p["psp"]):
        pooled = adaptive_avg_pool(x, scale)
        y = conv_bn_act(pooled, cp, relu=True)
        outs.append(bilinear_resize(y, H, W))
    cat = jnp.concatenate(outs, axis=-1)
    y = conv_bn_act(cat, p["conv_last1"], padding=1, relu=True)
    y = conv_bn_act(y, p["conv_last2"])
    return y


def mulrefnet_fwd(x_nchw, p):
    x = jnp.transpose(x_nchw, (0, 2, 3, 1)).astype(jnp.float32)  # NCHW -> NHWC
    x = conv_bn_act(x, p["conv1"], stride=2, padding=1, relu=True)
    x = conv_bn_act(x, p["conv2"], stride=2, padding=1, relu=True)
    x = conv_bn_act(x, p["conv3"], stride=2, padding=1, relu=True)
    x = maxpool_3x3_s2_p1(x)
    x = layer_fwd(x, p["layer1"])
    x = layer_fwd(x, p["layer2"])
    x0 = layer_fwd(x, p["layer3"])
    x0_ = layer_fwd(x0, p["layer4"])
    x2 = aspp_fwd(x0, p["layer5"])
    x1 = psp_fwd(lax.stop_gradient(x0_), p["layer6"])          # .detach()
    o_a = conv_bn_act(x, p["conv1x1_l2"], padding=4, dilation=4, relu=True)
    o_b = conv_bn_act(x0, p["conv1x1_l3"], padding=2, dilation=2, relu=True)
    out = jnp.concatenate([o_a, o_b, x2], axis=-1)
    y = conv_bn_act(out, p["conv_oneplus1"], padding=4, dilation=4, relu=True)
    # Dropout(0.1) is identity in eval mode.
    x3 = conv_bn_act(y, p["conv_oneplus2"])
    to_nchw = lambda t: jnp.transpose(t, (0, 3, 1, 2))
    return to_nchw(x1), to_nchw(x2), to_nchw(x3)


if __name__ == "__main__":
    key = jax.random.PRNGKey(0)
    pkey, xkey = jax.random.split(key)

    num_classes = 4
    layers = [1, 1, 1, 1]          # small, consistent ResNet-Bottleneck config
    params = prepare_params(mulrefnet_params(pkey, layers, num_classes))

    # NCHW input, like the PyTorch module expects.
    x = jax.random.normal(xkey, (2, 3, 64, 64), dtype=jnp.float32)

    x1, x2, x3 = mulrefnet_fwd(x, params)
    jax.block_until_ready((x1, x2, x3))

    assert x1.shape == (2, num_classes, 2, 2)
    assert x2.shape == (2, num_classes, 2, 2)
    assert x3.shape == (2, num_classes, 2, 2)
    assert all(bool(jnp.all(jnp.isfinite(t))) for t in (x1, x2, x3))
    print("KERNEL_OK")
</pallas_src>

<mosaic_0001>
module attributes {stable_mosaic.version = 11 : i64} {
  func.func @_mm_kernel(%arg0: i32, %arg1: i32, %arg2: i32, %arg3: memref<512x128xbf16, #tpu.memory_space<vmem>>, %arg4: memref<128x128xbf16, #tpu.memory_space<vmem>>, %arg5: memref<1x128xf32, #tpu.memory_space<vmem>>, %arg6: memref<1x128xf32, #tpu.memory_space<vmem>>, %arg7: memref<512x128xf32, #tpu.memory_space<vmem>>, %arg8: memref<512x128xf32, #tpu.memory_space<vmem>>) attributes {dimension_semantics = [#tpu.dimension_semantics<parallel>, #tpu.dimension_semantics<parallel>, #tpu.dimension_semantics<arbitrary>], iteration_bounds = array<i64: 4, 1, 1>, scalar_prefetch = 0 : i64, scratch_operands = 1 : i64, tpu.core_type = #tpu.core_type<tc>, window_params = [{transform_indices = @transform_0, window_bounds = array<i64: 512, 128>}, {transform_indices = @transform_1, window_bounds = array<i64: 128, 128>}, {transform_indices = @transform_2, window_bounds = array<i64: 1, 128>}, {transform_indices = @transform_3, window_bounds = array<i64: 1, 128>}, {transform_indices = @transform_4, window_bounds = array<i64: 512, 128>}]} {
    %c0_i32 = arith.constant 0 : i32
    %0 = arith.cmpi eq, %arg2, %c0_i32 : i32
    %1 = arith.extui %0 : i1 to i32
    %c0_i32_0 = arith.constant 0 : i32
    %2 = arith.cmpi ne, %1, %c0_i32_0 : i32
    scf.if %2 {
      %cst_10 = arith.constant 0.000000e+00 : f32
      %12 = vector.broadcast %cst_10 : f32 to vector<512x128xf32>
      %c0_11 = arith.constant 0 : index
      %c0_12 = arith.constant 0 : index
      %13 = vector.load %arg8[%c0_11, %c0_12] : memref<512x128xf32, #tpu.memory_space<vmem>>, vector<512x128xf32>
      tpu.vector_store %arg8[%c0_11, %c0_12], %12 {strides = array<i32>} : memref<512x128xf32, #tpu.memory_space<vmem>>, vector<512x128xf32>,
    } else {
    }
    %c0 = arith.constant 0 : index
    %c0_1 = arith.constant 0 : index
    %3 = vector.load %arg8[%c0, %c0_1] : memref<512x128xf32, #tpu.memory_space<vmem>>, vector<512x128xf32>
    %c0_2 = arith.constant 0 : index
    %c0_3 = arith.constant 0 : index
    %4 = vector.load %arg3[%c0_2, %c0_3] : memref<512x128xbf16, #tpu.memory_space<vmem>>, vector<512x128xbf16>
    %c0_4 = arith.constant 0 : index
    %c0_5 = arith.constant 0 : index
    %5 = vector.load %arg4[%c0_4, %c0_5] : memref<128x128xbf16, #tpu.memory_space<vmem>>, vector<128x128xbf16>
    %cst = arith.constant dense<0.000000e+00> : vector<512x128xf32>
    %6 = tpu.matmul %4, %5, %cst {dimension_numbers = #tpu.dot_dimension_numbers<[1], [0], [0], [1], [0, 0, 1, 1], [], []>} : vector<512x128xbf16>, vector<128x128xbf16>, vector<512x128xf32> -> vector<512x128xf32>
    %7 = arith.addf %3, %6 : vector<512x128xf32>
    %c0_6 = arith.constant 0 : index
    %c0_7 = arith.constant 0 : index
    %8 = vector.load %arg8[%c0_6, %c0_7] : memref<512x128xf32, #tpu.memory_space<vmem>>, vector<512x128xf32>
    tpu.vector_store %arg8[%c0_6, %c0_7], %7 {strides = array<i32>} : memref<512x128xf32, #tpu.memory_space<vmem>>, vector<512x128xf32>,
    %c0_i32_8 = arith.constant 0 : i32
    %9 = arith.cmpi eq, %arg2, %c0_i32_8 : i32
    %10 = arith.extui %9 : i1 to i32
    %c0_i32_9 = arith.constant 0 : i32
    %11 = arith.cmpi ne, %10, %c0_i32_9 : i32
    scf.if %11 {
      %c0_10 = arith.constant 0 : index
      %c0_11 = arith.constant 0 : index
      %12 = vector.load %arg8[%c0_10, %c0_11] : memref<512x128xf32, #tpu.memory_space<vmem>>, vector<512x128xf32>
      %c0_12 = arith.constant 0 : index
      %c0_13 = arith.constant 0 : index
      %13 = vector.load %arg5[%c0_12, %c0_13] : memref<1x128xf32, #tpu.memory_space<vmem>>, vector<1x128xf32>
      %14 = vector.broadcast %13 : vector<1x128xf32> to vector<512x128xf32>
      %15 = arith.mulf %12, %14 : vector<512x128xf32>
      %c0_14 = arith.constant 0 : index
      %c0_15 = arith.constant 0 : index
      %16 = vector.load %arg6[%c0_14, %c0_15] : memref<1x128xf32, #tpu.memory_space<vmem>>, vector<1x128xf32>
      %17 = vector.broadcast %16 : vector<1x128xf32> to vector<512x128xf32>
      %18 = arith.addf %15, %17 : vector<512x128xf32>
      %cst_16 = arith.constant 0.000000e+00 : f32
      %19 = vector.broadcast %cst_16 : f32 to vector<512x128xf32>
      %20 = arith.maximumf %18, %19 : vector<512x128xf32>
      %c0_17 = arith.constant 0 : index
      %c0_18 = arith.constant 0 : index
      %21 = vector.load %arg7[%c0_17, %c0_18] : memref<512x128xf32, #tpu.memory_space<vmem>>, vector<512x128xf32>
      tpu.vector_store %arg7[%c0_17, %c0_18], %20 {strides = array<i32>} : memref<512x128xf32, #tpu.memory_space<vmem>>, vector<512x128xf32>,
    } else {
    }
    return
  }
  func.func @transform_0(%arg0: i32, %arg1: i32, %arg2: i32) -> (i32, i32) {
    %c0_i32 = arith.constant 0 : i32
    return %arg0, %arg2 : i32, i32
  }
  func.func @transform_1(%arg0: i32, %arg1: i32, %arg2: i32) -> (i32, i32) {
    %c0_i32 = arith.constant 0 : i32
    return %arg2, %arg1 : i32, i32
  }
  func.func @transform_2(%arg0: i32, %arg1: i32, %arg2: i32) -> (i32, i32) {
    %c0_i32 = arith.constant 0 : i32
    %c0_i32_0 = arith.constant 0 : i32
    return %c0_i32, %arg1 : i32, i32
  }
  func.func @transform_3(%arg0: i32, %arg1: i32, %arg2: i32) -> (i32, i32) {
    %c0_i32 = arith.constant 0 : i32
    %c0_i32_0 = arith.constant 0 : i32
    return %c0_i32, %arg1 : i32, i32
  }
  func.func @transform_4(%arg0: i32, %arg1: i32, %arg2: i32) -> (i32, i32) {
    %c0_i32 = arith.constant 0 : i32
    return %arg0, %arg1 : i32, i32
  }
}

</mosaic_0001>

<llo_original>
// kernel: _conv_impl.1
$region0: #{_conv_impl.1}
  #allocation0 [shape = 'u32[]', space=smem, size = 0x4, offset = 0x4, fixed_abs, tag = 'smem constant byte address 0x4 - core index']
  #allocation1 [shape = 'u32[144,128]{1,0:T(1,128)}', space=vmem, size = 0x12000, scoped, tag = 'internal scratch']
  #allocation2 [shape = 'f32[512,128]{1,0:T(8,128)}', space=vmem, size = 0x40000, scoped, tag = 'scratch operand']
  %s0 = inlined_call_operand.vmem [shape: bf16[2048,128], index: 0, kind: input, shape index: {}]
  %s1 = inlined_call_operand.vmem [shape: bf16[128,128], index: 1, kind: input, shape index: {}]
  %s2 = inlined_call_operand.vmem [shape: f32[1,128], index: 2, kind: input, shape index: {}]
  %s3 = inlined_call_operand.vmem [shape: f32[1,128], index: 3, kind: input, shape index: {}]
  %s4 = inlined_call_operand.hbm [shape: f32[2048,128], index: 4, kind: output, shape index: {}]
  %s5 = sld [smem:[#allocation0]]
  $region57: #{_conv_impl.1} parent=0
    _
  %s7 = ssub.s32 1, %s5
  %s8 = scalar_select 0, %s7, %s5
  $region1: #{_conv_impl.1} parent=0
    #allocation3 [shape = 'u8[524288]{0}', space=vmem, size = 0x80000, scoped, tag = 'output window, operand 0']
    #allocation4 [shape = 's32[2]{0}', space=sflag, size = 0x8, scoped, tag = 'scoped memory for _conv_impl.1']
    %9 = vsyncpa [#allocation4], 0
    %s10 = scalar_lea.sflag [#allocation4], 1
    %11 = vsyncpa %s10, 0
    loop: start=0, step=1, limit=6
    $region2: #{_conv_impl.1} parent=1 // loop_pre_header
      _
    $region3: #{_conv_impl.1} parent=1 // loop_header
      %s13 = sphi 0, %s17
      %p14 = scmp.ge.s32.totalorder %s13, 6
      %s20 = sphi 0, %s39
      %s21 = sphi 0, %s35
      %s22 = sphi 0, %s31
      %s23 = sphi 0, %s20
      %s24 = sphi 0, %s21
      %s25 = sphi 0, %s22
      %s26 = sphi 0, %s23
      %s27 = sphi 0, %s24
      %s28 = sphi 0, %s25
      %s44 = sphi 0, %s46
      %s47 = sphi 0, %s44
      %s48 = sphi 0, %s47
      %s64 = sphi 0, %s48
      %s72 = sphi 0, %s74
      %s75 = sphi 0, %s72
      %s76 = sphi 0, %s75
      %s92 = sphi 0, %s76
      %s98 = sphi 0, %s100
      %s101 = sphi 0, %s98
      %s102 = sphi 0, %s101
      %s118 = sphi 0, %s102
      %s124 = sphi 0, %s126
      %s127 = sphi 0, %s124
      %s128 = sphi 0, %s127
      %s144 = sphi 0, %s128
      %s152 = sphi 0, %s154
      %s155 = sphi 0, %s152
      %s156 = sphi 0, %s155
      %s172 = sphi 0, %s156
    $region4: #{_conv_impl.1} parent=1 // loop_header_branch
      %16 = sbr.rel (%p14) target = $region8
    $region5: #{_conv_impl.1} parent=1 // loop_body
      %s18 = ssub.s32 %s13, 1
      %s19 = ssub.s32 %s13, 2
      %s29 = sadd.s32 1, %s22
      %p30 = scmp.ge.s32.totalorder %s29, 1
      %s31 = scalar_select %p30, 0, %s29
      %s32 = sadd.s32 1, %s21
      %s33 = scalar_select %p30, %s32, %s21
      %p34 = scmp.ge.s32.totalorder %s33, 1
      %s35 = scalar_select %p34, 0, %s33
      %s36 = sadd.s32 1, %s20
      %s37 = scalar_select %p34, %s36, %s20
      %p38 = scmp.ge.s32.totalorder %s37, 4
      %s39 = scalar_select %p38, 0, %s37
      %s40 = ssub.s32 %s20, %s39
      %s41 = ssub.s32 %s22, %s31
      %s42 = sor.u32 %s40, %s41
      %p43 = scmp.eq.s32.totalorder %s42, 0
      %s45 = sadd.s32 %s44, 1
      %s46 = scalar_select %p43, %s44, %s45
      %p49 = pneg %p43
      %p50 = scmp.eq.s32.totalorder %s13, 3
      %p51 = por %p49, %p50
      %p52 = scmp.ne.s32.totalorder %s44, %s47
      %p53 = scmp.eq.s32.totalorder %s13, 0
      %p54 = por %p52, %p53
      %p55 = scmp.ne.s32.totalorder %s44, %s47
      %p56 = scmp.eq.s32.totalorder %s18, 3
      %p57 = por %p55, %p56
      %p58 = scmp.ne.s32.totalorder %s47, %s48
      %p59 = scmp.eq.s32.totalorder %s18, 0
      %p60 = por %p58, %p59
      %p61 = scmp.ne.s32.totalorder %s47, %s48
      %p62 = scmp.eq.s32.totalorder %s19, 3
      %p63 = por %p61, %p62
      %p65 = scmp.ne.s32.totalorder %s48, %s64
      %p66 = scmp.eq.s32.totalorder %s19, 0
      %p67 = por %p65, %p66
      %s68 = ssub.s32 %s22, %s31
      %s69 = ssub.s32 %s21, %s35
      %s70 = sor.u32 %s68, %s69
      %p71 = scmp.eq.s32.totalorder %s70, 0
      %s73 = sadd.s32 %s72, 1
      %s74 = scalar_select %p71, %s72, %s73
      %p77 = pneg %p71
      %p78 = scmp.eq.s32.totalorder %s13, 3
      %p79 = por %p77, %p78
      %p80 = scmp.ne.s32.totalorder %s72, %s75
      %p81 = scmp.eq.s32.totalorder %s13, 0
      %p82 = por %p80, %p81
      %p83 = scmp.ne.s32.totalorder %s72, %s75
      %p84 = scmp.eq.s32.totalorder %s18, 3
      %p85 = por %p83, %p84
      %p86 = scmp.ne.s32.totalorder %s75, %s76
      %p87 = scmp.eq.s32.totalorder %s18, 0
      %p88 = por %p86, %p87
      %p89 = scmp.ne.s32.totalorder %s75, %s76
      %p90 = scmp.eq.s32.totalorder %s19, 3
      %p91 = por %p89, %p90
      %p93 = scmp.ne.s32.totalorder %s76, %s92
      %p94 = scmp.eq.s32.totalorder %s19, 0
      %p95 = por %p93, %p94
      %s96 = ssub.s32 %s21, %s35
      %p97 = scmp.eq.s32.totalorder %s96, 0
      %s99 = sadd.s32 %s98, 1
      %s100 = scalar_select %p97, %s98, %s99
      %p103 = pneg %p97
      %p104 = scmp.eq.s32.totalorder %s13, 3
      %p105 = por %p103, %p104
      %p106 = scmp.ne.s32.totalorder %s98, %s101
      %p107 = scmp.eq.s32.totalorder %s13, 0
      %p108 = por %p106, %p107
      %p109 = scmp.ne.s32.totalorder %s98, %s101
      %p110 = scmp.eq.s32.totalorder %s18, 3
      %p111 = por %p109, %p110
      %p112 = scmp.ne.s32.totalorder %s101, %s102
      %p113 = scmp.eq.s32.totalorder %s18, 0
      %p114 = por %p112, %p113
      %p115 = scmp.ne.s32.totalorder %s101, %s102
      %p116 = scmp.eq.s32.totalorder %s19, 3
      %p117 = por %p115, %p116
      %p119 = scmp.ne.s32.totalorder %s102, %s118
      %p120 = scmp.eq.s32.totalorder %s19, 0
      %p121 = por %p119, %p120
      %s122 = ssub.s32 %s21, %s35
      %p123 = scmp.eq.s32.totalorder %s122, 0
      %s125 = sadd.s32 %s124, 1
      %s126 = scalar_select %p123, %s124, %s125
      %p129 = pneg %p123
      %p130 = scmp.eq.s32.totalorder %s13, 3
      %p131 = por %p129, %p130
      %p132 = scmp.ne.s32.totalorder %s124, %s127
      %p133 = scmp.eq.s32.totalorder %s13, 0
      %p134 = por %p132, %p133
      %p135 = scmp.ne.s32.totalorder %s124, %s127
      %p136 = scmp.eq.s32.totalorder %s18, 3
      %p137 = por %p135, %p136
      %p138 = scmp.ne.s32.totalorder %s127, %s128
      %p139 = scmp.eq.s32.totalorder %s18, 0
      %p140 = por %p138, %p139
      %p141 = scmp.ne.s32.totalorder %s127, %s128
      %p142 = scmp.eq.s32.totalorder %s19, 3
      %p143 = por %p141, %p142
      %p145 = scmp.ne.s32.totalorder %s128, %s144
      %p146 = scmp.eq.s32.totalorder %s19, 0
      %p147 = por %p145, %p146
      %s148 = ssub.s32 %s20, %s39
      %s149 = ssub.s32 %s21, %s35
      %s150 = sor.u32 %s148, %s149
      %p151 = scmp.eq.s32.totalorder %s150, 0
      %s153 = sadd.s32 %s152, 1
      %s154 = scalar_select %p151, %s152, %s153
      %p157 = pneg %p151
      %p158 = scmp.eq.s32.totalorder %s13, 3
      %p159 = por %p157, %p158
      %p160 = scmp.ne.s32.totalorder %s152, %s155
      %p161 = scmp.eq.s32.totalorder %s13, 0
      %p162 = por %p160, %p161
      %p163 = scmp.ne.s32.totalorder %s152, %s155
      %p164 = scmp.eq.s32.totalorder %s18, 3
      %p165 = por %p163, %p164
      %p166 = scmp.ne.s32.totalorder %s155, %s156
      %p167 = scmp.eq.s32.totalorder %s18, 0
      %p168 = por %p166, %p167
      %p169 = scmp.ne.s32.totalorder %s155, %s156
      %p170 = scmp.eq.s32.totalorder %s19, 3
      %p171 = por %p169, %p170
      %p173 = scmp.ne.s32.totalorder %s156, %s172
      %p174 = scmp.eq.s32.totalorder %s19, 0
      %p175 = por %p173, %p174
      %p176 = scmp.le.s32.totalorder 1, %s13
      %p177 = scmp.lt.s32.totalorder %s13, 5
      %p178 = pnand %p176, %p177
      %p179 = pneg %p178
      // Predicated region
      $region9: #{_conv_impl.1} parent=5 // pred_check
        _
      $region10: #{_conv_impl.1} parent=5 // pred_check_branch
        %181 = sbr.rel (%p178) target = $region12
      $region11: #{_conv_impl.1} parent=5 // pred_region
        %s182 = ssub.s32 %s13, 1
        // Predicated region
        $region13: #{_conv_impl.1} parent=11 // pred_check
          %p183 = pneg %p88
        $region14: #{_conv_impl.1} parent=11 // pred_check_branch
          %185 = sbr.rel (%p183) target = $region16
        $region15: #{_conv_impl.1} parent=11 // pred_region
          %s186 = smul.u32 16, %s25
          %p187 = scmp.lt.s32.totalorder %s186, 15
          %s188 = scalar_select %p187, %s186, 15
          %p189 = scmp.lt.s32.totalorder %s24, 0
          %s190 = scalar_select %p189, %s24, 0
          %s191 = sadd.s32 %s190, %s188
          %s192 = smul.addr %s191, 4
          %s193 = scalar_lea.vmem %s1, %s192
          %s194 = smul.u32 16, %s25
        $region16: #{_conv_impl.1} parent=11 // pred_fallthru
          _
        // Predicated region
        $region17: #{_conv_impl.1} parent=11 // pred_check
          %p195 = pneg %p114
        $region18: #{_conv_impl.1} parent=11 // pred_check_branch
          %197 = sbr.rel (%p195) target = $region20
        $region19: #{_conv_impl.1} parent=11 // pred_region
          %p198 = scmp.lt.s32.totalorder %s24, 0
          %s199 = scalar_select %p198, %s24, 0
          %s200 = scalar_lea.vmem %s2, %s199
        $region20: #{_conv_impl.1} parent=11 // pred_fallthru
          _
        // Predicated region
        $region21: #{_conv_impl.1} parent=11 // pred_check
          %p201 = pneg %p140
        $region22: #{_conv_impl.1} parent=11 // pred_check_branch
          %203 = sbr.rel (%p201) target = $region24
        $region23: #{_conv_impl.1} parent=11 // pred_region
          %p204 = scmp.lt.s32.totalorder %s24, 0
          %s205 = scalar_select %p204, %s24, 0
          %s206 = scalar_lea.vmem %s3, %s205
        $region24: #{_conv_impl.1} parent=11 // pred_fallthru
          _
      $region12: #{_conv_impl.1} parent=5 // pred_fallthru
        _
      %p207 = scmp.lt.s32.totalorder %s13, 4
      // Predicated region
      $region25: #{_conv_impl.1} parent=5 // pred_check
        %p208 = pneg %p207
      $region26: #{_conv_impl.1} parent=5 // pred_check_branch
        %210 = sbr.rel (%p208) target = $region28
      $region27: #{_conv_impl.1} parent=5 // pred_region
        // Predicated region
        $region29: #{_conv_impl.1} parent=27 // pred_check
          %p211 = pneg %p54
        $region30: #{_conv_impl.1} parent=27 // pred_check_branch
          %213 = sbr.rel (%p211) target = $region32
        $region31: #{_conv_impl.1} parent=27 // pred_region
          %s214 = smul.u32 64, %s20
          %p215 = scmp.lt.s32.totalorder %s214, 255
          %s216 = scalar_select %p215, %s214, 255
          %p217 = scmp.lt.s32.totalorder %s22, 0
          %s218 = scalar_select %p217, %s22, 0
          %s219 = sadd.s32 %s218, %s216
          %s220 = smul.addr %s219, 4
          %s221 = scalar_lea.vmem %s0, %s220
          %s222 = smul.u32 64, %s20
        $region32: #{_conv_impl.1} parent=27 // pred_fallthru
          _
      $region28: #{_conv_impl.1} parent=5 // pred_fallthru
        _
      %p223 = scmp.le.s32.totalorder 1, %s13
      %p224 = scmp.lt.s32.totalorder %s13, 5
      %p225 = pnand %p223, %p224
      %p226 = pneg %p225
      // Predicated region
      $region33: #{_conv_impl.1} parent=5 // pred_check
        _
      $region34: #{_conv_impl.1} parent=5 // pred_check_branch
        %228 = sbr.rel (%p225) target = $region36
      $region35: #{_conv_impl.1} parent=5 // pred_region
        %s229 = ssub.s32 %s13, 1
        %s230 = smul.u32 64, %s23
        %p231 = scmp.lt.s32.totalorder %s230, 255
        %s232 = scalar_select %p231, %s230, 255
        %p233 = scmp.lt.s32.totalorder %s25, 0
        %s234 = scalar_select %p233, %s25, 0
        %s235 = sadd.s32 %s234, %s232
        %s236 = smul.addr %s235, 4
        %s237 = scalar_lea.vmem %s0, %s236
        %p238 = pneg %p60
        %p239 = pneg %p57
        %s240 = smul.u32 16, %s25
        %p241 = scmp.lt.s32.totalorder %s240, 15
        %s242 = scalar_select %p241, %s240, 15
        %p243 = scmp.lt.s32.totalorder %s24, 0
        %s244 = scalar_select %p243, %s24, 0
        %s245 = sadd.s32 %s244, %s242
        %s246 = smul.addr %s245, 4
        %s247 = scalar_lea.vmem %s1, %s246
        %p248 = pneg %p88
        %p249 = pneg %p85
        %p250 = scmp.lt.s32.totalorder %s24, 0
        %s251 = scalar_select %p250, %s24, 0
        %s252 = scalar_lea.vmem %s2, %s251
        %p253 = pneg %p114
        %p254 = pneg %p111
        %p255 = scmp.lt.s32.totalorder %s24, 0
        %s256 = scalar_select %p255, %s24, 0
        %s257 = scalar_lea.vmem %s3, %s256
        %p258 = pneg %p140
        %p259 = pneg %p137
        %p260 = pneg %p168
        %p261 = pneg %p165
        %s262 = sand.u32 %s155, 1
        %s263 = scalar_lea.sflag [#allocation4], %s262
        %s264 = sand.u32 %s155, 1
        %s265 = smul.addr %s264, 512
        %s266 = scalar_lea.vmem [#allocation3], %s265
        %s267 = smul.u32 64, %s23
        %p268 = scmp.lt.s32.totalorder %s267, 255
        %s269 = scalar_select %p268, %s267, 255
        %p270 = scmp.lt.s32.totalorder %s25, 0
        %s271 = scalar_select %p270, %s25, 0
        %s272 = sadd.s32 %s271, %s269
        %s273 = smul.addr %s272, 4
        %s274 = scalar_lea.vmem %s0, %s273
        %s275 = smul.u32 64, %s23
        %s276 = smul.u32 16, %s25
        %p277 = scmp.lt.s32.totalorder %s276, 15
        %s278 = scalar_select %p277, %s276, 15
        %p279 = scmp.lt.s32.totalorder %s24, 0
        %s280 = scalar_select %p279, %s24, 0
        %s281 = sadd.s32 %s280, %s278
        %s282 = smul.addr %s281, 4
        %s283 = scalar_lea.vmem %s1, %s282
        %s284 = smul.u32 16, %s25
        %p285 = scmp.lt.s32.totalorder %s24, 0
        %s286 = scalar_select %p285, %s24, 0
        %s287 = scalar_lea.vmem %s2, %s286
        %p288 = scmp.lt.s32.totalorder %s24, 0
        %s289 = scalar_select %p288, %s24, 0
        %s290 = scalar_lea.vmem %s3, %s289
        %s291 = smul.u32 64, %s23
        %p293 = scmp.eq.s32.totalorder %s25, 0
        // Predicated region
        $region37: #{_conv_impl.1} parent=35 // pred_check
          %p294 = pneg %p293
        $region38: #{_conv_impl.1} parent=35 // pred_check_branch
          %296 = sbr.rel (%p294) target = $region40
        $region39: #{_conv_impl.1} parent=35 // pred_region
          %297 = vst [vmem:[#allocation2] sm:$0xff] 0.0
          %298 = vst [vmem:[#allocation2 + $0x8] sm:$0xff] 0.0
          %299 = vst [vmem:[#allocation2 + $0x10] sm:$0xff] 0.0
          %300 = vst [vmem:[#allocation2 + $0x18] sm:$0xff] 0.0
          %301 = vst [vmem:[#allocation2 + $0x20] sm:$0xff] 0.0
          %302 = vst [vmem:[#allocation2 + $0x28] sm:$0xff] 0.0
          %303 = vst [vmem:[#allocation2 + $0x30] sm:$0xff] 0.0
          %304 = vst [vmem:[#allocation2 + $0x38] sm:$0xff] 0.0
          %305 = vst [vmem:[#allocation2 + $0x40] sm:$0xff] 0.0
          %306 = vst [vmem:[#allocation2 + $0x48] sm:$0xff] 0.0
          %307 = vst [vmem:[#allocation2 + $0x50] sm:$0xff] 0.0
          %308 = vst [vmem:[#allocation2 + $0x58] sm:$0xff] 0.0
          %309 = vst [vmem:[#allocation2 + $0x60] sm:$0xff] 0.0
          %310 = vst [vmem:[#allocation2 + $0x68] sm:$0xff] 0.0
          %311 = vst [vmem:[#allocation2 + $0x70] sm:$0xff] 0.0
          %312 = vst [vmem:[#allocation2 + $0x78] sm:$0xff] 0.0
          %313 = vst [vmem:[#allocation2 + $0x80] sm:$0xff] 0.0
          %314 = vst [vmem:[#allocation2 + $0x88] sm:$0xff] 0.0
          %315 = vst [vmem:[#allocation2 + $0x90] sm:$0xff] 0.0
          %316 = vst [vmem:[#allocation2 + $0x98] sm:$0xff] 0.0
          %317 = vst [vmem:[#allocation2 + $0xa0] sm:$0xff] 0.0
          %318 = vst [vmem:[#allocation2 + $0xa8] sm:$0xff] 0.0
          %319 = vst [vmem:[#allocation2 + $0xb0] sm:$0xff] 0.0
          %320 = vst [vmem:[#allocation2 + $0xb8] sm:$0xff] 0.0
          %321 = vst [vmem:[#allocation2 + $0xc0] sm:$0xff] 0.0
          %322 = vst [vmem:[#allocation2 + $0xc8] sm:$0xff] 0.0
          %323 = vst [vmem:[#allocation2 + $0xd0] sm:$0xff] 0.0
          %324 = vst [vmem:[#allocation2 + $0xd8] sm:$0xff] 0.0
          %325 = vst [vmem:[#allocation2 + $0xe0] sm:$0xff] 0.0
          %326 = vst [vmem:[#allocation2 + $0xe8] sm:$0xff] 0.0
          %327 = vst [vmem:[#allocation2 + $0xf0] sm:$0xff] 0.0
          %328 = vst [vmem:[#allocation2 + $0xf8] sm:$0xff] 0.0
          %329 = vst [vmem:[#allocation2 + $0x100] sm:$0xff] 0.0
          %330 = vst [vmem:[#allocation2 + $0x108] sm:$0xff] 0.0
          %331 = vst [vmem:[#allocation2 + $0x110] sm:$0xff] 0.0
          %332 = vst [vmem:[#allocation2 + $0x118] sm:$0xff] 0.0
          %333 = vst [vmem:[#allocation2 + $0x120] sm:$0xff] 0.0
          %334 = vst [vmem:[#allocation2 + $0x128] sm:$0xff] 0.0
          %335 = vst [vmem:[#allocation2 + $0x130] sm:$0xff] 0.0
          %336 = vst [vmem:[#allocation2 + $0x138] sm:$0xff] 0.0
          %337 = vst [vmem:[#allocation2 + $0x140] sm:$0xff] 0.0
          %338 = vst [vmem:[#allocation2 + $0x148] sm:$0xff] 0.0
          %339 = vst [vmem:[#allocation2 + $0x150] sm:$0xff] 0.0
          %340 = vst [vmem:[#allocation2 + $0x158] sm:$0xff] 0.0
          %341 = vst [vmem:[#allocation2 + $0x160] sm:$0xff] 0.0
          %342 = vst [vmem:[#allocation2 + $0x168] sm:$0xff] 0.0
          %343 = vst [vmem:[#allocation2 + $0x170] sm:$0xff] 0.0
          %344 = vst [vmem:[#allocation2 + $0x178] sm:$0xff] 0.0
          %345 = vst [vmem:[#allocation2 + $0x180] sm:$0xff] 0.0
          %346 = vst [vmem:[#allocation2 + $0x188] sm:$0xff] 0.0
          %347 = vst [vmem:[#allocation2 + $0x190] sm:$0xff] 0.0
          %348 = vst [vmem:[#allocation2 + $0x198] sm:$0xff] 0.0
          %349 = vst [vmem:[#allocation2 + $0x1a0] sm:$0xff] 0.0
          %350 = vst [vmem:[#allocation2 + $0x1a8] sm:$0xff] 0.0
          %351 = vst [vmem:[#allocation2 + $0x1b0] sm:$0xff] 0.0
          %352 = vst [vmem:[#allocation2 + $0x1b8] sm:$0xff] 0.0
          %353 = vst [vmem:[#allocation2 + $0x1c0] sm:$0xff] 0.0
          %354 = vst [vmem:[#allocation2 + $0x1c8] sm:$0xff] 0.0
          %355 = vst [vmem:[#allocation2 + $0x1d0] sm:$0xff] 0.0
          %356 = vst [vmem:[#allocation2 + $0x1d8] sm:$0xff] 0.0
          %357 = vst [vmem:[#allocation2 + $0x1e0] sm:$0xff] 0.0
          %358 = vst [vmem:[#allocation2 + $0x1e8] sm:$0xff] 0.0
          %359 = vst [vmem:[#allocation2 + $0x1f0] sm:$0xff] 0.0
          %360 = vst [vmem:[#allocation2 + $0x1f8] sm:$0xff] 0.0
        $region40: #{_conv_impl.1} parent=35 // pred_fallthru
          _
        %v361 = vld [vmem:[#allocation2] sm:$0xff]
        %v362 = vld [vmem:[#allocation2 + $0x8] sm:$0xff]
        %v363 = vld [vmem:[#allocation2 + $0x10] sm:$0xff]
        %v364 = vld [vmem:[#allocation2 + $0x18] sm:$0xff]
        %v365 = vld [vmem:[#allocation2 + $0x20] sm:$0xff]
        %v366 = vld [vmem:[#allocation2 + $0x28] sm:$0xff]
        %v367 = vld [vmem:[#allocation2 + $0x30] sm:$0xff]
        %v368 = vld [vmem:[#allocation2 + $0x38] sm:$0xff]
        %v369 = vld [vmem:[#allocation2 + $0x40] sm:$0xff]
        %v370 = vld [vmem:[#allocation2 + $0x48] sm:$0xff]
        %v371 = vld [vmem:[#allocation2 + $0x50] sm:$0xff]
        %v372 = vld [vmem:[#allocation2 + $0x58] sm:$0xff]
        %v373 = vld [vmem:[#allocation2 + $0x60] sm:$0xff]
        %v374 = vld [vmem:[#allocation2 + $0x68] sm:$0xff]
        %v375 = vld [vmem:[#allocation2 + $0x70] sm:$0xff]
        %v376 = vld [vmem:[#allocation2 + $0x78] sm:$0xff]
        %v377 = vld [vmem:[#allocation2 + $0x80] sm:$0xff]
        %v378 = vld [vmem:[#allocation2 + $0x88] sm:$0xff]
        %v379 = vld [vmem:[#allocation2 + $0x90] sm:$0xff]
        %v380 = vld [vmem:[#allocation2 + $0x98] sm:$0xff]
        %v381 = vld [vmem:[#allocation2 + $0xa0] sm:$0xff]
        %v382 = vld [vmem:[#allocation2 + $0xa8] sm:$0xff]
        %v383 = vld [vmem:[#allocation2 + $0xb0] sm:$0xff]
        %v384 = vld [vmem:[#allocation2 + $0xb8] sm:$0xff]
        %v385 = vld [vmem:[#allocation2 + $0xc0] sm:$0xff]
        %v386 = vld [vmem:[#allocation2 + $0xc8] sm:$0xff]
        %v387 = vld [vmem:[#allocation2 + $0xd0] sm:$0xff]
        %v388 = vld [vmem:[#allocation2 + $0xd8] sm:$0xff]
        %v389 = vld [vmem:[#allocation2 + $0xe0] sm:$0xff]
        %v390 = vld [vmem:[#allocation2 + $0xe8] sm:$0xff]
        %v391 = vld [vmem:[#allocation2 + $0xf0] sm:$0xff]
        %v392 = vld [vmem:[#allocation2 + $0xf8] sm:$0xff]
        %v393 = vld [vmem:[#allocation2 + $0x100] sm:$0xff]
        %v394 = vld [vmem:[#allocation2 + $0x108] sm:$0xff]
        %v395 = vld [vmem:[#allocation2 + $0x110] sm:$0xff]
        %v396 = vld [vmem:[#allocation2 + $0x118] sm:$0xff]
        %v397 = vld [vmem:[#allocation2 + $0x120] sm:$0xff]
        %v398 = vld [vmem:[#allocation2 + $0x128] sm:$0xff]
        %v399 = vld [vmem:[#allocation2 + $0x130] sm:$0xff]
        %v400 = vld [vmem:[#allocation2 + $0x138] sm:$0xff]
        %v401 = vld [vmem:[#allocation2 + $0x140] sm:$0xff]
        %v402 = vld [vmem:[#allocation2 + $0x148] sm:$0xff]
        %v403 = vld [vmem:[#allocation2 + $0x150] sm:$0xff]
        %v404 = vld [vmem:[#allocation2 + $0x158] sm:$0xff]
        %v405 = vld [vmem:[#allocation2 + $0x160] sm:$0xff]
        %v406 = vld [vmem:[#allocation2 + $0x168] sm:$0xff]
        %v407 = vld [vmem:[#allocation2 + $0x170] sm:$0xff]
        %v408 = vld [vmem:[#allocation2 + $0x178] sm:$0xff]
        %v409 = vld [vmem:[#allocation2 + $0x180] sm:$0xff]
        %v410 = vld [vmem:[#allocation2 + $0x188] sm:$0xff]
        %v411 = vld [vmem:[#allocation2 + $0x190] sm:$0xff]
        %v412 = vld [vmem:[#allocation2 + $0x198] sm:$0xff]
        %v413 = vld [vmem:[#allocation2 + $0x1a0] sm:$0xff]
        %v414 = vld [vmem:[#allocation2 + $0x1a8] sm:$0xff]
        %v415 = vld [vmem:[#allocation2 + $0x1b0] sm:$0xff]
        %v416 = vld [vmem:[#allocation2 + $0x1b8] sm:$0xff]
        %v417 = vld [vmem:[#allocation2 + $0x1c0] sm:$0xff]
        %v418 = vld [vmem:[#allocation2 + $0x1c8] sm:$0xff]
        %v419 = vld [vmem:[#allocation2 + $0x1d0] sm:$0xff]
        %v420 = vld [vmem:[#allocation2 + $0x1d8] sm:$0xff]
        %v421 = vld [vmem:[#allocation2 + $0x1e0] sm:$0xff]
        %v422 = vld [vmem:[#allocation2 + $0x1e8] sm:$0xff]
        %v423 = vld [vmem:[#allocation2 + $0x1f0] sm:$0xff]
        %v424 = vld [vmem:[#allocation2 + $0x1f8] sm:$0xff]
        %v425 = vld [vmem:[%s274] sm:$0xf]
        %v426 = vld [vmem:[%s274 + $0x4] sm:$0xf]
        %v427 = vld [vmem:[%s274 + $0x8] sm:$0xf]
        %v428 = vld [vmem:[%s274 + $0xc] sm:$0xf]
        %v429 = vld [vmem:[%s274 + $0x10] sm:$0xf]
        %v430 = vld [vmem:[%s274 + $0x14] sm:$0xf]
        %v431 = vld [vmem:[%s274 + $0x18] sm:$0xf]
        %v432 = vld [vmem:[%s274 + $0x1c] sm:$0xf]
        %v433 = vld [vmem:[%s274 + $0x20] sm:$0xf]
        %v434 = vld [vmem:[%s274 + $0x24] sm:$0xf]
        %v435 = vld [vmem:[%s274 + $0x28] sm:$0xf]
        %v436 = vld [vmem:[%s274 + $0x2c] sm:$0xf]
        %v437 = vld [vmem:[%s274 + $0x30] sm:$0xf]
        %v438 = vld [vmem:[%s274 + $0x34] sm:$0xf]
        %v439 = vld [vmem:[%s274 + $0x38] sm:$0xf]
        %v440 = vld [vmem:[%s274 + $0x3c] sm:$0xf]
        %v441 = vld [vmem:[%s274 + $0x40] sm:$0xf]
        %v442 = vld [vmem:[%s274 + $0x44] sm:$0xf]
        %v443 = vld [vmem:[%s274 + $0x48] sm:$0xf]
        %v444 = vld [vmem:[%s274 + $0x4c] sm:$0xf]
        %v445 = vld [vmem:[%s274 + $0x50] sm:$0xf]
        %v446 = vld [vmem:[%s274 + $0x54] sm:$0xf]
        %v447 = vld [vmem:[%s274 + $0x58] sm:$0xf]
        %v448 = vld [vmem:[%s274 + $0x5c] sm:$0xf]
        %v449 = vld [vmem:[%s274 + $0x60] sm:$0xf]
        %v450 = vld [vmem:[%s274 + $0x64] sm:$0xf]
        %v451 = vld [vmem:[%s274 + $0x68] sm:$0xf]
        %v452 = vld [vmem:[%s274 + $0x6c] sm:$0xf]
        %v453 = vld [vmem:[%s274 + $0x70] sm:$0xf]
        %v454 = vld [vmem:[%s274 + $0x74] sm:$0xf]
        %v455 = vld [vmem:[%s274 + $0x78] sm:$0xf]
        %v456 = vld [vmem:[%s274 + $0x7c] sm:$0xf]
        %v457 = vld [vmem:[%s274 + $0x80] sm:$0xf]
        %v458 = vld [vmem:[%s274 + $0x84] sm:$0xf]
        %v459 = vld [vmem:[%s274 + $0x88] sm:$0xf]
        %v460 = vld [vmem:[%s274 + $0x8c] sm:$0xf]
        %v461 = vld [vmem:[%s274 + $0x90] sm:$0xf]
        %v462 = vld [vmem:[%s274 + $0x94] sm:$0xf]
        %v463 = vld [vmem:[%s274 + $0x98] sm:$0xf]
        %v464 = vld [vmem:[%s274 + $0x9c] sm:$0xf]
        %v465 = vld [vmem:[%s274 + $0xa0] sm:$0xf]
        %v466 = vld [vmem:[%s274 + $0xa4] sm:$0xf]
        %v467 = vld [vmem:[%s274 + $0xa8] sm:$0xf]
        %v468 = vld [vmem:[%s274 + $0xac] sm:$0xf]
        %v469 = vld [vmem:[%s274 + $0xb0] sm:$0xf]
        %v470 = vld [vmem:[%s274 + $0xb4] sm:$0xf]
        %v471 = vld [vmem:[%s274 + $0xb8] sm:$0xf]
        %v472 = vld [vmem:[%s274 + $0xbc] sm:$0xf]
        %v473 = vld [vmem:[%s274 + $0xc0] sm:$0xf]
        %v474 = vld [vmem:[%s274 + $0xc4] sm:$0xf]
        %v475 = vld [vmem:[%s274 + $0xc8] sm:$0xf]
        %v476 = vld [vmem:[%s274 + $0xcc] sm:$0xf]
        %v477 = vld [vmem:[%s274 + $0xd0] sm:$0xf]
        %v478 = vld [vmem:[%s274 + $0xd4] sm:$0xf]
        %v479 = vld [vmem:[%s274 + $0xd8] sm:$0xf]
        %v480 = vld [vmem:[%s274 + $0xdc] sm:$0xf]
        %v481 = vld [vmem:[%s274 + $0xe0] sm:$0xf]
        %v482 = vld [vmem:[%s274 + $0xe4] sm:$0xf]
        %v483 = vld [vmem:[%s274 + $0xe8] sm:$0xf]
        %v484 = vld [vmem:[%s274 + $0xec] sm:$0xf]
        %v485 = vld [vmem:[%s274 + $0xf0] sm:$0xf]
        %v486 = vld [vmem:[%s274 + $0xf4] sm:$0xf]
        %v487 = vld [vmem:[%s274 + $0xf8] sm:$0xf]
        %v488 = vld [vmem:[%s274 + $0xfc] sm:$0xf]
        %v489 = vld [vmem:[%s283] sm:$0xf]
        %v490 = vld [vmem:[%s283 + $0x4] sm:$0xf]
        %v491 = vld [vmem:[%s283 + $0x8] sm:$0xf]
        %v492 = vld [vmem:[%s283 + $0xc] sm:$0xf]
        %v493 = vld [vmem:[%s283 + $0x10] sm:$0xf]
        %v494 = vld [vmem:[%s283 + $0x14] sm:$0xf]
        %v495 = vld [vmem:[%s283 + $0x18] sm:$0xf]
        %v496 = vld [vmem:[%s283 + $0x1c] sm:$0xf]
        %v497 = vld [vmem:[%s283 + $0x20] sm:$0xf]
        %v498 = vld [vmem:[%s283 + $0x24] sm:$0xf]
        %v499 = vld [vmem:[%s283 + $0x28] sm:$0xf]
        %v500 = vld [vmem:[%s283 + $0x2c] sm:$0xf]
        %v501 = vld [vmem:[%s283 + $0x30] sm:$0xf]
        %v502 = vld [vmem:[%s283 + $0x34] sm:$0xf]
        %v503 = vld [vmem:[%s283 + $0x38] sm:$0xf]
        %v504 = vld [vmem:[%s283 + $0x3c] sm:$0xf]
        %v569 = vunpack.c.l.b16 %v425
        %v570 = vunpack.c.l.b16 %v426
        %v571 = vunpack.c.l.b16 %v427
        %v572 = vunpack.c.l.b16 %v428
        %v573 = vunpack.c.l.b16 %v429
        %v574 = vunpack.c.l.b16 %v430
        %v575 = vunpack.c.l.b16 %v431
        %v576 = vunpack.c.l.b16 %v432
        %v577 = vunpack.c.l.b16 %v433
        %v578 = vunpack.c.l.b16 %v434
        %v579 = vunpack.c.l.b16 %v435
        %v580 = vunpack.c.l.b16 %v436
        %v581 = vunpack.c.l.b16 %v437
        %v582 = vunpack.c.l.b16 %v438
        %v583 = vunpack.c.l.b16 %v439
        %v584 = vunpack.c.l.b16 %v440
        %v585 = vunpack.c.l.b16 %v441
        %v586 = vunpack.c.l.b16 %v442
        %v587 = vunpack.c.l.b16 %v443
        %v588 = vunpack.c.l.b16 %v444
        %v589 = vunpack.c.l.b16 %v445
        %v590 = vunpack.c.l.b16 %v446
        %v591 = vunpack.c.l.b16 %v447
        %v592 = vunpack.c.l.b16 %v448
        %v593 = vunpack.c.l.b16 %v449
        %v594 = vunpack.c.l.b16 %v450
        %v595 = vunpack.c.l.b16 %v451
        %v596 = vunpack.c.l.b16 %v452
        %v597 = vunpack.c.l.b16 %v453
        %v598 = vunpack.c.l.b16 %v454
        %v599 = vunpack.c.l.b16 %v455
        %v600 = vunpack.c.l.b16 %v456
        %v601 = vunpack.c.l.b16 %v457
        %v602 = vunpack.c.l.b16 %v458
        %v603 = vunpack.c.l.b16 %v459
        %v604 = vunpack.c.l.b16 %v460
        %v605 = vunpack.c.l.b16 %v461
        %v606 = vunpack.c.l.b16 %v462
        %v607 = vunpack.c.l.b16 %v463
        %v608 = vunpack.c.l.b16 %v464
        %v609 = vunpack.c.l.b16 %v465
        %v610 = vunpack.c.l.b16 %v466
        %v611 = vunpack.c.l.b16 %v467
        %v612 = vunpack.c.l.b16 %v468
        %v613 = vunpack.c.l.b16 %v469
        %v614 = vunpack.c.l.b16 %v470
        %v615 = vunpack.c.l.b16 %v471
        %v616 = vunpack.c.l.b16 %v472
        %v617 = vunpack.c.l.b16 %v473
        %v618 = vunpack.c.l.b16 %v474
        %v619 = vunpack.c.l.b16 %v475
        %v620 = vunpack.c.l.b16 %v476
        %v621 = vunpack.c.l.b16 %v477
        %v622 = vunpack.c.l.b16 %v478
        %v623 = vunpack.c.l.b16 %v479
        %v624 = vunpack.c.l.b16 %v480
        %v625 = vunpack.c.l.b16 %v481
        %v626 = vunpack.c.l.b16 %v482
        %v627 = vunpack.c.l.b16 %v483
        %v628 = vunpack.c.l.b16 %v484
        %v629 = vunpack.c.l.b16 %v485
        %v630 = vunpack.c.l.b16 %v486
        %v631 = vunpack.c.l.b16 %v487
        %v632 = vunpack.c.l.b16 %v488
        %v633 = vpack.c.b16 %v570, %v569
        %v634 = vpack.c.b16 %v572, %v571
        %v635 = vpack.c.b16 %v574, %v573
        %v636 = vpack.c.b16 %v576, %v575
        %v637 = vpack.c.b16 %v578, %v577
        %v638 = vpack.c.b16 %v580, %v579
        %v639 = vpack.c.b16 %v582, %v581
        %v640 = vpack.c.b16 %v584, %v583
        %v641 = vpack.c.b16 %v586, %v585
        %v642 = vpack.c.b16 %v588, %v587
        %v643 = vpack.c.b16 %v590, %v589
        %v644 = vpack.c.b16 %v592, %v591
        %v645 = vpack.c.b16 %v594, %v593
        %v646 = vpack.c.b16 %v596, %v595
        %v647 = vpack.c.b16 %v598, %v597
        %v648 = vpack.c.b16 %v600, %v599
        %v649 = vpack.c.b16 %v602, %v601
        %v650 = vpack.c.b16 %v604, %v603
        %v651 = vpack.c.b16 %v606, %v605
        %v652 = vpack.c.b16 %v608, %v607
        %v653 = vpack.c.b16 %v610, %v609
        %v654 = vpack.c.b16 %v612, %v611
        %v655 = vpack.c.b16 %v614, %v613
        %v656 = vpack.c.b16 %v616, %v615
        %v657 = vpack.c.b16 %v618, %v617
        %v658 = vpack.c.b16 %v620, %v619
        %v659 = vpack.c.b16 %v622, %v621
        %v660 = vpack.c.b16 %v624, %v623
        %v661 = vpack.c.b16 %v626, %v625
        %v662 = vpack.c.b16 %v628, %v627
        %v663 = vpack.c.b16 %v630, %v629
        %v664 = vpack.c.b16 %v632, %v631
        %v713 = vunpack.c.l.b16 %v489
        %v714 = vunpack.c.l.b16 %v490
        %v715 = vunpack.c.l.b16 %v491
        %v716 = vunpack.c.l.b16 %v492
        %v717 = vunpack.c.l.b16 %v493
        %v718 = vunpack.c.l.b16 %v494
        %v719 = vunpack.c.l.b16 %v495
        %v720 = vunpack.c.l.b16 %v496
        %v721 = vunpack.c.l.b16 %v497
        %v722 = vunpack.c.l.b16 %v498
        %v723 = vunpack.c.l.b16 %v499
        %v724 = vunpack.c.l.b16 %v500
        %v725 = vunpack.c.l.b16 %v501
        %v726 = vunpack.c.l.b16 %v502
        %v727 = vunpack.c.l.b16 %v503
        %v728 = vunpack.c.l.b16 %v504
        %v729 = vpack.c.b16 %v714, %v713
        %v730 = vpack.c.b16 %v716, %v715
        %v731 = vpack.c.b16 %v718, %v717
        %v732 = vpack.c.b16 %v720, %v719
        %v733 = vpack.c.b16 %v722, %v721
        %v734 = vpack.c.b16 %v724, %v723
        %v735 = vpack.c.b16 %v726, %v725
        %v736 = vpack.c.b16 %v728, %v727
        %745 = vmatprep.subr.bf16.mxu0 0
        %746 = vmatpush1.bf16.msra.mxu0 %v736
        %747 = vmatprep.subr.bf16.mxu0 0
        %748 = vmatpush1.bf16.msra.mxu0 %v735
        %749 = vmatprep.subr.bf16.mxu0 0
        %750 = vmatpush1.bf16.msra.mxu0 %v734
        %751 = vmatprep.subr.bf16.mxu0 0
        %752 = vmatpush1.bf16.msra.mxu0 %v733
        %753 = vmatprep.subr.bf16.mxu0 0
        %754 = vmatpush1.bf16.msra.mxu0 %v732
        %755 = vmatprep.subr.bf16.mxu0 0
        %756 = vmatpush1.bf16.msra.mxu0 %v731
        %757 = vmatprep.subr.bf16.mxu0 0
        %758 = vmatpush1.bf16.msra.mxu0 %v730
        %759 = vmatprep.subr.bf16.mxu0 0
        %760 = vmatpush1.bf16.msra.mxu0 %v729
        %761 = vmatprep.subr.bf16.mxu0 0
        %762 = vmatpush2.bf16.msra.mxu0 0
        %763 = vmatprep.subr.bf16.mxu0 0
        %764 = vmatpush2.bf16.msra.mxu0 0
        %765 = vmatprep.subr.bf16.mxu0 0
        %766 = vmatpush2.bf16.msra.mxu0 0
        %767 = vmatprep.subr.bf16.mxu0 0
        %768 = vmatpush2.bf16.msra.mxu0 0
        %769 = vmatprep.subr.bf16.mxu0 0
        %770 = vmatpush2.bf16.msra.mxu0 0
        %771 = vmatprep.subr.bf16.mxu0 0
        %772 = vmatpush2.bf16.msra.mxu0 0
        %773 = vmatprep.subr.bf16.mxu0 0
        %774 = vmatpush2.bf16.msra.mxu0 0
        %775 = vmatprep.subr.bf16.mxu0 0
        %776 = vmatpush2.bf16.msra.mxu0 0
        %777 = vmatprep.mubr.bf16.mxu0 0
        %778 = vmatmul.mubr.bf16.gmra.mxu0 %v633
        %v779 = vpop.f32.mrf.mxu0
        %v780 = vadd.f32 0.0, %v779
        %v781 = vpop.f32.mrf.mxu0
        %v782 = vpop.f32.mrf.mxu0
        %v783 = vadd.f32 0.0, %v782
        %v784 = vpop.f32.mrf.mxu0
        %785 = vmatprep.mubr.bf16.mxu0 0
        %786 = vmatmul.mubr.bf16.gmra.mxu0 %v634
        %v787 = vpop.f32.mrf.mxu0
        %v788 = vadd.f32 0.0, %v787
        %v789 = vpop.f32.mrf.mxu0
        %v790 = vpop.f32.mrf.mxu0
        %v791 = vadd.f32 0.0, %v790
        %v792 = vpop.f32.mrf.mxu0
        %793 = vmatprep.mubr.bf16.mxu0 0
        %794 = vmatmul.mubr.bf16.gmra.mxu0 %v635
        %v795 = vpop.f32.mrf.mxu0
        %v796 = vadd.f32 0.0, %v795
        %v797 = vpop.f32.mrf.mxu0
        %v798 = vpop.f32.mrf.mxu0
        %v799 = vadd.f32 0.0, %v798
        %v800 = vpop.f32.mrf.mxu0
        %801 = vmatprep.mubr.bf16.mxu0 0
        %802 = vmatmul.mubr.bf16.gmra.mxu0 %v636
        %v803 = vpop.f32.mrf.mxu0
        %v804 = vadd.f32 0.0, %v803
        %v805 = vpop.f32.mrf.mxu0
        %v806 = vpop.f32.mrf.mxu0
        %v807 = vadd.f32 0.0, %v806
        %v808 = vpop.f32.mrf.mxu0
        %809 = vmatprep.mubr.bf16.mxu0 0
        %810 = vmatmul.mubr.bf16.gmra.mxu0 %v637
        %v811 = vpop.f32.mrf.mxu0
        %v812 = vadd.f32 0.0, %v811
        %v813 = vpop.f32.mrf.mxu0
        %v814 = vpop.f32.mrf.mxu0
        %v815 = vadd.f32 0.0, %v814
        %v816 = vpop.f32.mrf.mxu0
        %817 = vmatprep.mubr.bf16.mxu0 0
        %818 = vmatmul.mubr.bf16.gmra.mxu0 %v638
        %v819 = vpop.f32.mrf.mxu0
        %v820 = vadd.f32 0.0, %v819
        %v821 = vpop.f32.mrf.mxu0
        %v822 = vpop.f32.mrf.mxu0
        %v823 = vadd.f32 0.0, %v822
        %v824 = vpop.f32.mrf.mxu0
        %825 = vmatprep.mubr.bf16.mxu0 0
        %826 = vmatmul.mubr.bf16.gmra.mxu0 %v639
        %v827 = vpop.f32.mrf.mxu0
        %v828 = vadd.f32 0.0, %v827
        %v829 = vpop.f32.mrf.mxu0
        %v830 = vpop.f32.mrf.mxu0
        %v831 = vadd.f32 0.0, %v830
        %v832 = vpop.f32.mrf.mxu0
        %833 = vmatprep.mubr.bf16.mxu0 0
        %834 = vmatmul.mubr.bf16.gmra.mxu0 %v640
        %v835 = vpop.f32.mrf.mxu0
        %v836 = vadd.f32 0.0, %v835
        %v837 = vpop.f32.mrf.mxu0
        %v838 = vpop.f32.mrf.mxu0
        %v839 = vadd.f32 0.0, %v838
        %v840 = vpop.f32.mrf.mxu0
        %841 = vmatprep.mubr.bf16.mxu0 0
        %842 = vmatmul.mubr.bf16.gmra.mxu0 %v641
        %v843 = vpop.f32.mrf.mxu0
        %v844 = vadd.f32 0.0, %v843
        %v845 = vpop.f32.mrf.mxu0
        %v846 = vpop.f32.mrf.mxu0
        %v847 = vadd.f32 0.0, %v846
        %v848 = vpop.f32.mrf.mxu0
        %849 = vmatprep.mubr.bf16.mxu0 0
        %850 = vmatmul.mubr.bf16.gmra.mxu0 %v642
        %v851 = vpop.f32.mrf.mxu0
        %v852 = vadd.f32 0.0, %v851
        %v853 = vpop.f32.mrf.mxu0
        %v854 = vpop.f32.mrf.mxu0
        %v855 = vadd.f32 0.0, %v854
        %v856 = vpop.f32.mrf.mxu0
        %857 = vmatprep.mubr.bf16.mxu0 0
        %858 = vmatmul.mubr.bf16.gmra.mxu0 %v643
        %v859 = vpop.f32.mrf.mxu0
        %v860 = vadd.f32 0.0, %v859
        %v861 = vpop.f32.mrf.mxu0
        %v862 = vpop.f32.mrf.mxu0
        %v863 = vadd.f32 0.0, %v862
        %v864 = vpop.f32.mrf.mxu0
        %865 = vmatprep.mubr.bf16.mxu0 0
        %866 = vmatmul.mubr.bf16.gmra.mxu0 %v644
        %v867 = vpop.f32.mrf.mxu0
        %v868 = vadd.f32 0.0, %v867
        %v869 = vpop.f32.mrf.mxu0
        %v870 = vpop.f32.mrf.mxu0
        %v871 = vadd.f32 0.0, %v870
        %v872 = vpop.f32.mrf.mxu0
        %873 = vmatprep.mubr.bf16.mxu0 0
        %874 = vmatmul.mubr.bf16.gmra.mxu0 %v645
        %v875 = vpop.f32.mrf.mxu0
        %v876 = vadd.f32 0.0, %v875
        %v877 = vpop.f32.mrf.mxu0
        %v878 = vpop.f32.mrf.mxu0
        %v879 = vadd.f32 0.0, %v878
        %v880 = vpop.f32.mrf.mxu0
        %881 = vmatprep.mubr.bf16.mxu0 0
        %882 = vmatmul.mubr.bf16.gmra.mxu0 %v646
        %v883 = vpop.f32.mrf.mxu0
        %v884 = vadd.f32 0.0, %v883
        %v885 = vpop.f32.mrf.mxu0
        %v886 = vpop.f32.mrf.mxu0
        %v887 = vadd.f32 0.0, %v886
        %v888 = vpop.f32.mrf.mxu0
        %889 = vmatprep.mubr.bf16.mxu0 0
        %890 = vmatmul.mubr.bf16.gmra.mxu0 %v647
        %v891 = vpop.f32.mrf.mxu0
        %v892 = vadd.f32 0.0, %v891
        %v893 = vpop.f32.mrf.mxu0
        %v894 = vpop.f32.mrf.mxu0
        %v895 = vadd.f32 0.0, %v894
        %v896 = vpop.f32.mrf.mxu0
        %897 = vmatprep.mubr.bf16.mxu0 0
        %898 = vmatmul.mubr.bf16.gmra.mxu0 %v648
        %v899 = vpop.f32.mrf.mxu0
        %v900 = vadd.f32 0.0, %v899
        %v901 = vpop.f32.mrf.mxu0
        %v902 = vpop.f32.mrf.mxu0
        %v903 = vadd.f32 0.0, %v902
        %v904 = vpop.f32.mrf.mxu0
        %905 = vmatprep.mubr.bf16.mxu0 0
        %906 = vmatmul.mubr.bf16.gmra.mxu0 %v649
        %v907 = vpop.f32.mrf.mxu0
        %v908 = vadd.f32 0.0, %v907
        %v909 = vpop.f32.mrf.mxu0
        %v910 = vpop.f32.mrf.mxu0
        %v911 = vadd.f32 0.0, %v910
        %v912 = vpop.f32.mrf.mxu0
        %913 = vmatprep.mubr.bf16.mxu0 0
        %914 = vmatmul.mubr.bf16.gmra.mxu0 %v650
        %v915 = vpop.f32.mrf.mxu0
        %v916 = vadd.f32 0.0, %v915
        %v917 = vpop.f32.mrf.mxu0
        %v918 = vpop.f32.mrf.mxu0
        %v919 = vadd.f32 0.0, %v918
        %v920 = vpop.f32.mrf.mxu0
        %921 = vmatprep.mubr.bf16.mxu0 0
        %922 = vmatmul.mubr.bf16.gmra.mxu0 %v651
        %v923 = vpop.f32.mrf.mxu0
        %v924 = vadd.f32 0.0, %v923
        %v925 = vpop.f32.mrf.mxu0
        %v926 = vpop.f32.mrf.mxu0
        %v927 = vadd.f32 0.0, %v926
        %v928 = vpop.f32.mrf.mxu0
        %929 = vmatprep.mubr.bf16.mxu0 0
        %930 = vmatmul.mubr.bf16.gmra.mxu0 %v652
        %v931 = vpop.f32.mrf.mxu0
        %v932 = vadd.f32 0.0, %v931
        %v933 = vpop.f32.mrf.mxu0
        %v934 = vpop.f32.mrf.mxu0
        %v935 = vadd.f32 0.0, %v934
        %v936 = vpop.f32.mrf.mxu0
        %937 = vmatprep.mubr.bf16.mxu0 0
        %938 = vmatmul.mubr.bf16.gmra.mxu0 %v653
        %v939 = vpop.f32.mrf.mxu0
        %v940 = vadd.f32 0.0, %v939
        %v941 = vpop.f32.mrf.mxu0
        %v942 = vpop.f32.mrf.mxu0
        %v943 = vadd.f32 0.0, %v942
        %v944 = vpop.f32.mrf.mxu0
        %945 = vmatprep.mubr.bf16.mxu0 0
        %946 = vmatmul.mubr.bf16.gmra.mxu0 %v654
        %v947 = vpop.f32.mrf.mxu0
        %v948 = vadd.f32 0.0, %v947
        %v949 = vpop.f32.mrf.mxu0
        %v950 = vpop.f32.mrf.mxu0
        %v951 = vadd.f32 0.0, %v950
        %v952 = vpop.f32.mrf.mxu0
        %953 = vmatprep.mubr.bf16.mxu0 0
        %954 = vmatmul.mubr.bf16.gmra.mxu0 %v655
        %v955 = vpop.f32.mrf.mxu0
        %v956 = vadd.f32 0.0, %v955
        %v957 = vpop.f32.mrf.mxu0
        %v958 = vpop.f32.mrf.mxu0
        %v959 = vadd.f32 0.0, %v958
        %v960 = vpop.f32.mrf.mxu0
        %961 = vmatprep.mubr.bf16.mxu0 0
        %962 = vmatmul.mubr.bf16.gmra.mxu0 %v656
        %v963 = vpop.f32.mrf.mxu0
        %v964 = vadd.f32 0.0, %v963
        %v965 = vpop.f32.mrf.mxu0
        %v966 = vpop.f32.mrf.mxu0
        %v967 = vadd.f32 0.0, %v966
        %v968 = vpop.f32.mrf.mxu0
        %969 = vmatprep.mubr.bf16.mxu0 0
        %970 = vmatmul.mubr.bf16.gmra.mxu0 %v657
        %v971 = vpop.f32.mrf.mxu0
        %v972 = vadd.f32 0.0, %v971
        %v973 = vpop.f32.mrf.mxu0
        %v974 = vpop.f32.mrf.mxu0
        %v975 = vadd.f32 0.0, %v974
        %v976 = vpop.f32.mrf.mxu0
        %977 = vmatprep.mubr.bf16.mxu0 0
        %978 = vmatmul.mubr.bf16.gmra.mxu0 %v658
        %v979 = vpop.f32.mrf.mxu0
        %v980 = vadd.f32 0.0, %v979
        %v981 = vpop.f32.mrf.mxu0
        %v982 = vpop.f32.mrf.mxu0
        %v983 = vadd.f32 0.0, %v982
        %v984 = vpop.f32.mrf.mxu0
        %985 = vmatprep.mubr.bf16.mxu0 0
        %986 = vmatmul.mubr.bf16.gmra.mxu0 %v659
        %v987 = vpop.f32.mrf.mxu0
        %v988 = vadd.f32 0.0, %v987
        %v989 = vpop.f32.mrf.mxu0
        %v990 = vpop.f32.mrf.mxu0
        %v991 = vadd.f32 0.0, %v990
        %v992 = vpop.f32.mrf.mxu0
        %993 = vmatprep.mubr.bf16.mxu0 0
        %994 = vmatmul.mubr.bf16.gmra.mxu0 %v660
        %v995 = vpop.f32.mrf.mxu0
        %v996 = vadd.f32 0.0, %v995
        %v997 = vpop.f32.mrf.mxu0
        %v998 = vpop.f32.mrf.mxu0
        %v999 = vadd.f32 0.0, %v998
        %v1000 = vpop.f32.mrf.mxu0
        %1001 = vmatprep.mubr.bf16.mxu0 0
        %1002 = vmatmul.mubr.bf16.gmra.mxu0 %v661
        %v1003 = vpop.f32.mrf.mxu0
        %v1004 = vadd.f32 0.0, %v1003
        %v1005 = vpop.f32.mrf.mxu0
        %v1006 = vpop.f32.mrf.mxu0
        %v1007 = vadd.f32 0.0, %v1006
        %v1008 = vpop.f32.mrf.mxu0
        %1009 = vmatprep.mubr.bf16.mxu0 0
        %1010 = vmatmul.mubr.bf16.gmra.mxu0 %v662
        %v1011 = vpop.f32.mrf.mxu0
        %v1012 = vadd.f32 0.0, %v1011
        %v1013 = vpop.f32.mrf.mxu0
        %v1014 = vpop.f32.mrf.mxu0
        %v1015 = vadd.f32 0.0, %v1014
        %v1016 = vpop.f32.mrf.mxu0
        %1017 = vmatprep.mubr.bf16.mxu0 0
        %1018 = vmatmul.mubr.bf16.gmra.mxu0 %v663
        %v1019 = vpop.f32.mrf.mxu0
        %v1020 = vadd.f32 0.0, %v1019
        %v1021 = vpop.f32.mrf.mxu0
        %v1022 = vpop.f32.mrf.mxu0
        %v1023 = vadd.f32 0.0, %v1022
        %v1024 = vpop.f32.mrf.mxu0
        %1025 = vmatprep.mubr.bf16.mxu0 0
        %1026 = vmatmul.mubr.bf16.gmra.mxu0 %v664
        %v1027 = vpop.f32.mrf.mxu0
        %v1028 = vadd.f32 0.0, %v1027
        %v1029 = vpop.f32.mrf.mxu0
        %v1030 = vpop.f32.mrf.mxu0
        %v1031 = vadd.f32 0.0, %v1030
        %v1032 = vpop.f32.mrf.mxu0
        %1033 = vdwg.mxu0
        %v1034 = vadd.f32 %v361, %v780
        %v1035 = vadd.f32 %v362, %v783
        %v1036 = vadd.f32 %v363, %v788
        %v1037 = vadd.f32 %v364, %v791
        %v1038 = vadd.f32 %v365, %v796
        %v1039 = vadd.f32 %v366, %v799
        %v1040 = vadd.f32 %v367, %v804
        %v1041 = vadd.f32 %v368, %v807
        %v1042 = vadd.f32 %v369, %v812
        %v1043 = vadd.f32 %v370, %v815
        %v1044 = vadd.f32 %v371, %v820
        %v1045 = vadd.f32 %v372, %v823
        %v1046 = vadd.f32 %v373, %v828
        %v1047 = vadd.f32 %v374, %v831
        %v1048 = vadd.f32 %v375, %v836
        %v1049 = vadd.f32 %v376, %v839
        %v1050 = vadd.f32 %v377, %v844
        %v1051 = vadd.f32 %v378, %v847
        %v1052 = vadd.f32 %v379, %v852
        %v1053 = vadd.f32 %v380, %v855
        %v1054 = vadd.f32 %v381, %v860
        %v1055 = vadd.f32 %v382, %v863
        %v1056 = vadd.f32 %v383, %v868
        %v1057 = vadd.f32 %v384, %v871
        %v1058 = vadd.f32 %v385, %v876
        %v1059 = vadd.f32 %v386, %v879
        %v1060 = vadd.f32 %v387, %v884
        %v1061 = vadd.f32 %v388, %v887
        %v1062 = vadd.f32 %v389, %v892
        %v1063 = vadd.f32 %v390, %v895
        %v1064 = vadd.f32 %v391, %v900
        %v1065 = vadd.f32 %v392, %v903
        %v1066 = vadd.f32 %v393, %v908
        %v1067 = vadd.f32 %v394, %v911
        %v1068 = vadd.f32 %v395, %v916
        %v1069 = vadd.f32 %v396, %v919
        %v1070 = vadd.f32 %v397, %v924
        %v1071 = vadd.f32 %v398, %v927
        %v1072 = vadd.f32 %v399, %v932
        %v1073 = vadd.f32 %v400, %v935
        %v1074 = vadd.f32 %v401, %v940
        %v1075 = vadd.f32 %v402, %v943
        %v1076 = vadd.f32 %v403, %v948
        %v1077 = vadd.f32 %v404, %v951
        %v1078 = vadd.f32 %v405, %v956
        %v1079 = vadd.f32 %v406, %v959
        %v1080 = vadd.f32 %v407, %v964
        %v1081 = vadd.f32 %v408, %v967
        %v1082 = vadd.f32 %v409, %v972
        %v1083 = vadd.f32 %v410, %v975
        %v1084 = vadd.f32 %v411, %v980
        %v1085 = vadd.f32 %v412, %v983
        %v1086 = vadd.f32 %v413, %v988
        %v1087 = vadd.f32 %v414, %v991
        %v1088 = vadd.f32 %v415, %v996
        %v1089 = vadd.f32 %v416, %v999
        %v1090 = vadd.f32 %v417, %v1004
        %v1091 = vadd.f32 %v418, %v1007
        %v1092 = vadd.f32 %v419, %v1012
        %v1093 = vadd.f32 %v420, %v1015
        %v1094 = vadd.f32 %v421, %v1020
        %v1095 = vadd.f32 %v422, %v1023
        %v1096 = vadd.f32 %v423, %v1028
        %v1097 = vadd.f32 %v424, %v1031
        %1098 = vst [vmem:[#allocation2] sm:$0xff] %v1034
        %1099 = vst [vmem:[#allocation2 + $0x8] sm:$0xff] %v1035
        %1100 = vst [vmem:[#allocation2 + $0x10] sm:$0xff] %v1036
        %1101 = vst [vmem:[#allocation2 + $0x18] sm:$0xff] %v1037
        %1102 = vst [vmem:[#allocation2 + $0x20] sm:$0xff] %v1038
        %1103 = vst [vmem:[#allocation2 + $0x28] sm:$0xff] %v1039
        %1104 = vst [vmem:[#allocation2 + $0x30] sm:$0xff] %v1040
        %1105 = vst [vmem:[#allocation2 + $0x38] sm:$0xff] %v1041
        %1106 = vst [vmem:[#allocation2 + $0x40] sm:$0xff] %v1042
        %1107 = vst [vmem:[#allocation2 + $0x48] sm:$0xff] %v1043
        %1108 = vst [vmem:[#allocation2 + $0x50] sm:$0xff] %v1044
        %1109 = vst [vmem:[#allocation2 + $0x58] sm:$0xff] %v1045
        %1110 = vst [vmem:[#allocation2 + $0x60] sm:$0xff] %v1046
        %1111 = vst [vmem:[#allocation2 + $0x68] sm:$0xff] %v1047
        %1112 = vst [vmem:[#allocation2 + $0x70] sm:$0xff] %v1048
        %1113 = vst [vmem:[#allocation2 + $0x78] sm:$0xff] %v1049
        %1114 = vst [vmem:[#allocation2 + $0x80] sm:$0xff] %v1050
        %1115 = vst [vmem:[#allocation2 + $0x88] sm:$0xff] %v1051
        %1116 = vst [vmem:[#allocation2 + $0x90] sm:$0xff] %v1052
        %1117 = vst [vmem:[#allocation2 + $0x98] sm:$0xff] %v1053
        %1118 = vst [vmem:[#allocation2 + $0xa0] sm:$0xff] %v1054
        %1119 = vst [vmem:[#allocation2 + $0xa8] sm:$0xff] %v1055
        %1120 = vst [vmem:[#allocation2 + $0xb0] sm:$0xff] %v1056
        %1121 = vst [vmem:[#allocation2 + $0xb8] sm:$0xff] %v1057
        %1122 = vst [vmem:[#allocation2 + $0xc0] sm:$0xff] %v1058
        %1123 = vst [vmem:[#allocation2 + $0xc8] sm:$0xff] %v1059
        %1124 = vst [vmem:[#allocation2 + $0xd0] sm:$0xff] %v1060
        %1125 = vst [vmem:[#allocation2 + $0xd8] sm:$0xff] %v1061
        %1126 = vst [vmem:[#allocation2 + $0xe0] sm:$0xff] %v1062
        %1127 = vst [vmem:[#allocation2 + $0xe8] sm:$0xff] %v1063
        %1128 = vst [vmem:[#allocation2 + $0xf0] sm:$0xff] %v1064
        %1129 = vst [vmem:[#allocation2 + $0xf8] sm:$0xff] %v1065
        %1130 = vst [vmem:[#allocation2 + $0x100] sm:$0xff] %v1066
        %1131 = vst [vmem:[#allocation2 + $0x108] sm:$0xff] %v1067
        %1132 = vst [vmem:[#allocation2 + $0x110] sm:$0xff] %v1068
        %1133 = vst [vmem:[#allocation2 + $0x118] sm:$0xff] %v1069
        %1134 = vst [vmem:[#allocation2 + $0x120] sm:$0xff] %v1070
        %1135 = vst [vmem:[#allocation2 + $0x128] sm:$0xff] %v1071
        %1136 = vst [vmem:[#allocation2 + $0x130] sm:$0xff] %v1072
        %1137 = vst [vmem:[#allocation2 + $0x138] sm:$0xff] %v1073
        %1138 = vst [vmem:[#allocation2 + $0x140] sm:$0xff] %v1074
        %1139 = vst [vmem:[#allocation2 + $0x148] sm:$0xff] %v1075
        %1140 = vst [vmem:[#allocation2 + $0x150] sm:$0xff] %v1076
        %1141 = vst [vmem:[#allocation2 + $0x158] sm:$0xff] %v1077
        %1142 = vst [vmem:[#allocation2 + $0x160] sm:$0xff] %v1078
        %1143 = vst [vmem:[#allocation2 + $0x168] sm:$0xff] %v1079
        %1144 = vst [vmem:[#allocation2 + $0x170] sm:$0xff] %v1080
        %1145 = vst [vmem:[#allocation2 + $0x178] sm:$0xff] %v1081
        %1146 = vst [vmem:[#allocation2 + $0x180] sm:$0xff] %v1082
        %1147 = vst [vmem:[#allocation2 + $0x188] sm:$0xff] %v1083
        %1148 = vst [vmem:[#allocation2 + $0x190] sm:$0xff] %v1084
        %1149 = vst [vmem:[#allocation2 + $0x198] sm:$0xff] %v1085
        %1150 = vst [vmem:[#allocation2 + $0x1a0] sm:$0xff] %v1086
        %1151 = vst [vmem:[#allocation2 + $0x1a8] sm:$0xff] %v1087
        %1152 = vst [vmem:[#allocation2 + $0x1b0] sm:$0xff] %v1088
        %1153 = vst [vmem:[#allocation2 + $0x1b8] sm:$0xff] %v1089
        %1154 = vst [vmem:[#allocation2 + $0x1c0] sm:$0xff] %v1090
        %1155 = vst [vmem:[#allocation2 + $0x1c8] sm:$0xff] %v1091
        %1156 = vst [vmem:[#allocation2 + $0x1d0] sm:$0xff] %v1092
        %1157 = vst [vmem:[#allocation2 + $0x1d8] sm:$0xff] %v1093
        %1158 = vst [vmem:[#allocation2 + $0x1e0] sm:$0xff] %v1094
        %1159 = vst [vmem:[#allocation2 + $0x1e8] sm:$0xff] %v1095
        %1160 = vst [vmem:[#allocation2 + $0x1f0] sm:$0xff] %v1096
        %1161 = vst [vmem:[#allocation2 + $0x1f8] sm:$0xff] %v1097
        // Predicated region
        $region41: #{_conv_impl.1} parent=35 // pred_check
          %p1162 = pneg %p293
        $region42: #{_conv_impl.1} parent=35 // pred_check_branch
          %1164 = sbr.rel (%p1162) target = $region44
        $region43: #{_conv_impl.1} parent=35 // pred_region
          %v1165 = vld [vmem:[#allocation2] sm:$0xff]
          %v1166 = vld [vmem:[#allocation2 + $0x8] sm:$0xff]
          %v1167 = vld [vmem:[#allocation2 + $0x10] sm:$0xff]
          %v1168 = vld [vmem:[#allocation2 + $0x18] sm:$0xff]
          %v1169 = vld [vmem:[#allocation2 + $0x20] sm:$0xff]
          %v1170 = vld [vmem:[#allocation2 + $0x28] sm:$0xff]
          %v1171 = vld [vmem:[#allocation2 + $0x30] sm:$0xff]
          %v1172 = vld [vmem:[#allocation2 + $0x38] sm:$0xff]
          %v1173 = vld [vmem:[#allocation2 + $0x40] sm:$0xff]
          %v1174 = vld [vmem:[#allocation2 + $0x48] sm:$0xff]
          %v1175 = vld [vmem:[#allocation2 + $0x50] sm:$0xff]
          %v1176 = vld [vmem:[#allocation2 + $0x58] sm:$0xff]
          %v1177 = vld [vmem:[#allocation2 + $0x60] sm:$0xff]
          %v1178 = vld [vmem:[#allocation2 + $0x68] sm:$0xff]
          %v1179 = vld [vmem:[#allocation2 + $0x70] sm:$0xff]
          %v1180 = vld [vmem:[#allocation2 + $0x78] sm:$0xff]
          %v1181 = vld [vmem:[#allocation2 + $0x80] sm:$0xff]
          %v1182 = vld [vmem:[#allocation2 + $0x88] sm:$0xff]
          %v1183 = vld [vmem:[#allocation2 + $0x90] sm:$0xff]
          %v1184 = vld [vmem:[#allocation2 + $0x98] sm:$0xff]
          %v1185 = vld [vmem:[#allocation2 + $0xa0] sm:$0xff]
          %v1186 = vld [vmem:[#allocation2 + $0xa8] sm:$0xff]
          %v1187 = vld [vmem:[#allocation2 + $0xb0] sm:$0xff]
          %v1188 = vld [vmem:[#allocation2 + $0xb8] sm:$0xff]
          %v1189 = vld [vmem:[#allocation2 + $0xc0] sm:$0xff]
          %v1190 = vld [vmem:[#allocation2 + $0xc8] sm:$0xff]
          %v1191 = vld [vmem:[#allocation2 + $0xd0] sm:$0xff]
          %v1192 = vld [vmem:[#allocation2 + $0xd8] sm:$0xff]
          %v1193 = vld [vmem:[#allocation2 + $0xe0] sm:$0xff]
          %v1194 = vld [vmem:[#allocation2 + $0xe8] sm:$0xff]
          %v1195 = vld [vmem:[#allocation2 + $0xf0] sm:$0xff]
          %v1196 = vld [vmem:[#allocation2 + $0xf8] sm:$0xff]
          %v1197 = vld [vmem:[#allocation2 + $0x100] sm:$0xff]
          %v1198 = vld [vmem:[#allocation2 + $0x108] sm:$0xff]
          %v1199 = vld [vmem:[#allocation2 + $0x110] sm:$0xff]
          %v1200 = vld [vmem:[#allocation2 + $0x118] sm:$0xff]
          %v1201 = vld [vmem:[#allocation2 + $0x120] sm:$0xff]
          %v1202 = vld [vmem:[#allocation2 + $0x128] sm:$0xff]
          %v1203 = vld [vmem:[#allocation2 + $0x130] sm:$0xff]
          %v1204 = vld [vmem:[#allocation2 + $0x138] sm:$0xff]
          %v1205 = vld [vmem:[#allocation2 + $0x140] sm:$0xff]
          %v1206 = vld [vmem:[#allocation2 + $0x148] sm:$0xff]
          %v1207 = vld [vmem:[#allocation2 + $0x150] sm:$0xff]
          %v1208 = vld [vmem:[#allocation2 + $0x158] sm:$0xff]
          %v1209 = vld [vmem:[#allocation2 + $0x160] sm:$0xff]
          %v1210 = vld [vmem:[#allocation2 + $0x168] sm:$0xff]
          %v1211 = vld [vmem:[#allocation2 + $0x170] sm:$0xff]
          %v1212 = vld [vmem:[#allocation2 + $0x178] sm:$0xff]
          %v1213 = vld [vmem:[#allocation2 + $0x180] sm:$0xff]
          %v1214 = vld [vmem:[#allocation2 + $0x188] sm:$0xff]
          %v1215 = vld [vmem:[#allocation2 + $0x190] sm:$0xff]
          %v1216 = vld [vmem:[#allocation2 + $0x198] sm:$0xff]
          %v1217 = vld [vmem:[#allocation2 + $0x1a0] sm:$0xff]
          %v1218 = vld [vmem:[#allocation2 + $0x1a8] sm:$0xff]
          %v1219 = vld [vmem:[#allocation2 + $0x1b0] sm:$0xff]
          %v1220 = vld [vmem:[#allocation2 + $0x1b8] sm:$0xff]
          %v1221 = vld [vmem:[#allocation2 + $0x1c0] sm:$0xff]
          %v1222 = vld [vmem:[#allocation2 + $0x1c8] sm:$0xff]
          %v1223 = vld [vmem:[#allocation2 + $0x1d0] sm:$0xff]
          %v1224 = vld [vmem:[#allocation2 + $0x1d8] sm:$0xff]
          %v1225 = vld [vmem:[#allocation2 + $0x1e0] sm:$0xff]
          %v1226 = vld [vmem:[#allocation2 + $0x1e8] sm:$0xff]
          %v1227 = vld [vmem:[#allocation2 + $0x1f0] sm:$0xff]
          %v1228 = vld [vmem:[#allocation2 + $0x1f8] sm:$0xff]
          %v1229 = vld [vmem:[%s287] sm:$0x1]
          %v1231 = vlaneseq
          %v1232 = vshrl.u32 %v1231, 7
          %v1233 = vsub.s32 0, %v1232
          %v1234 = vrot.slane %v1229, %v1233
          %v1236 = vmul.f32 %v1165, %v1234
          %v1237 = vmul.f32 %v1166, %v1234
          %v1238 = vmul.f32 %v1167, %v1234
          %v1239 = vmul.f32 %v1168, %v1234
          %v1240 = vmul.f32 %v1169, %v1234
          %v1241 = vmul.f32 %v1170, %v1234
          %v1242 = vmul.f32 %v1171, %v1234
          %v1243 = vmul.f32 %v1172, %v1234
          %v1244 = vmul.f32 %v1173, %v1234
          %v1245 = vmul.f32 %v1174, %v1234
          %v1246 = vmul.f32 %v1175, %v1234
          %v1247 = vmul.f32 %v1176, %v1234
          %v1248 = vmul.f32 %v1177, %v1234
          %v1249 = vmul.f32 %v1178, %v1234
          %v1250 = vmul.f32 %v1179, %v1234
          %v1251 = vmul.f32 %v1180, %v1234
          %v1252 = vmul.f32 %v1181, %v1234
          %v1253 = vmul.f32 %v1182, %v1234
          %v1254 = vmul.f32 %v1183, %v1234
          %v1255 = vmul.f32 %v1184, %v1234
          %v1256 = vmul.f32 %v1185, %v1234
          %v1257 = vmul.f32 %v1186, %v1234
          %v1258 = vmul.f32 %v1187, %v1234
          %v1259 = vmul.f32 %v1188, %v1234
          %v1260 = vmul.f32 %v1189, %v1234
          %v1261 = vmul.f32 %v1190, %v1234
          %v1262 = vmul.f32 %v1191, %v1234
          %v1263 = vmul.f32 %v1192, %v1234
          %v1264 = vmul.f32 %v1193, %v1234
          %v1265 = vmul.f32 %v1194, %v1234
          %v1266 = vmul.f32 %v1195, %v1234
          %v1267 = vmul.f32 %v1196, %v1234
          %v1268 = vmul.f32 %v1197, %v1234
          %v1269 = vmul.f32 %v1198, %v1234
          %v1270 = vmul.f32 %v1199, %v1234
          %v1271 = vmul.f32 %v1200, %v1234
          %v1272 = vmul.f32 %v1201, %v1234
          %v1273 = vmul.f32 %v1202, %v1234
          %v1274 = vmul.f32 %v1203, %v1234
          %v1275 = vmul.f32 %v1204, %v1234
          %v1276 = vmul.f32 %v1205, %v1234
          %v1277 = vmul.f32 %v1206, %v1234
          %v1278 = vmul.f32 %v1207, %v1234
          %v1279 = vmul.f32 %v1208, %v1234
          %v1280 = vmul.f32 %v1209, %v1234
          %v1281 = vmul.f32 %v1210, %v1234
          %v1282 = vmul.f32 %v1211, %v1234
          %v1283 = vmul.f32 %v1212, %v1234
          %v1284 = vmul.f32 %v1213, %v1234
          %v1285 = vmul.f32 %v1214, %v1234
          %v1286 = vmul.f32 %v1215, %v1234
          %v1287 = vmul.f32 %v1216, %v1234
          %v1288 = vmul.f32 %v1217, %v1234
          %v1289 = vmul.f32 %v1218, %v1234
          %v1290 = vmul.f32 %v1219, %v1234
          %v1291 = vmul.f32 %v1220, %v1234
          %v1292 = vmul.f32 %v1221, %v1234
          %v1293 = vmul.f32 %v1222, %v1234
          %v1294 = vmul.f32 %v1223, %v1234
          %v1295 = vmul.f32 %v1224, %v1234
          %v1296 = vmul.f32 %v1225, %v1234
          %v1297 = vmul.f32 %v1226, %v1234
          %v1298 = vmul.f32 %v1227, %v1234
          %v1299 = vmul.f32 %v1228, %v1234
          %v1300 = vld [vmem:[%s290] sm:$0x1]
          %v1302 = vlaneseq
          %v1303 = vshrl.u32 %v1302, 7
          %v1304 = vsub.s32 0, %v1303
          %v1305 = vrot.slane %v1300, %v1304
          %v1307 = vadd.f32 %v1236, %v1305
          %v1308 = vadd.f32 %v1237, %v1305
          %v1309 = vadd.f32 %v1238, %v1305
          %v1310 = vadd.f32 %v1239, %v1305
          %v1311 = vadd.f32 %v1240, %v1305
          %v1312 = vadd.f32 %v1241, %v1305
          %v1313 = vadd.f32 %v1242, %v1305
          %v1314 = vadd.f32 %v1243, %v1305
          %v1315 = vadd.f32 %v1244, %v1305
          %v1316 = vadd.f32 %v1245, %v1305
          %v1317 = vadd.f32 %v1246, %v1305
          %v1318 = vadd.f32 %v1247, %v1305
          %v1319 = vadd.f32 %v1248, %v1305
          %v1320 = vadd.f32 %v1249, %v1305
          %v1321 = vadd.f32 %v1250, %v1305
          %v1322 = vadd.f32 %v1251, %v1305
          %v1323 = vadd.f32 %v1252, %v1305
          %v1324 = vadd.f32 %v1253, %v1305
          %v1325 = vadd.f32 %v1254, %v1305
          %v1326 = vadd.f32 %v1255, %v1305
          %v1327 = vadd.f32 %v1256, %v1305
          %v1328 = vadd.f32 %v1257, %v1305
          %v1329 = vadd.f32 %v1258, %v1305
          %v1330 = vadd.f32 %v1259, %v1305
          %v1331 = vadd.f32 %v1260, %v1305
          %v1332 = vadd.f32 %v1261, %v1305
          %v1333 = vadd.f32 %v1262, %v1305
          %v1334 = vadd.f32 %v1263, %v1305
          %v1335 = vadd.f32 %v1264, %v1305
          %v1336 = vadd.f32 %v1265, %v1305
          %v1337 = vadd.f32 %v1266, %v1305
          %v1338 = vadd.f32 %v1267, %v1305
          %v1339 = vadd.f32 %v1268, %v1305
          %v1340 = vadd.f32 %v1269, %v1305
          %v1341 = vadd.f32 %v1270, %v1305
          %v1342 = vadd.f32 %v1271, %v1305
          %v1343 = vadd.f32 %v1272, %v1305
          %v1344 = vadd.f32 %v1273, %v1305
          %v1345 = vadd.f32 %v1274, %v1305
          %v1346 = vadd.f32 %v1275, %v1305
          %v1347 = vadd.f32 %v1276, %v1305
          %v1348 = vadd.f32 %v1277, %v1305
          %v1349 = vadd.f32 %v1278, %v1305
          %v1350 = vadd.f32 %v1279, %v1305
          %v1351 = vadd.f32 %v1280, %v1305
          %v1352 = vadd.f32 %v1281, %v1305
          %v1353 = vadd.f32 %v1282, %v1305
          %v1354 = vadd.f32 %v1283, %v1305
          %v1355 = vadd.f32 %v1284, %v1305
          %v1356 = vadd.f32 %v1285, %v1305
          %v1357 = vadd.f32 %v1286, %v1305
          %v1358 = vadd.f32 %v1287, %v1305
          %v1359 = vadd.f32 %v1288, %v1305
          %v1360 = vadd.f32 %v1289, %v1305
          %v1361 = vadd.f32 %v1290, %v1305
          %v1362 = vadd.f32 %v1291, %v1305
          %v1363 = vadd.f32 %v1292, %v1305
          %v1364 = vadd.f32 %v1293, %v1305
          %v1365 = vadd.f32 %v1294, %v1305
          %v1366 = vadd.f32 %v1295, %v1305
          %v1367 = vadd.f32 %v1296, %v1305
          %v1368 = vadd.f32 %v1297, %v1305
          %v1369 = vadd.f32 %v1298, %v1305
          %v1370 = vadd.f32 %v1299, %v1305
          %v1371 = vmax.f32 %v1307, 0.0
          %v1372 = vmax.f32 %v1308, 0.0
          %v1373 = vmax.f32 %v1309, 0.0
          %v1374 = vmax.f32 %v1310, 0.0
          %v1375 = vmax.f32 %v1311, 0.0
          %v1376 = vmax.f32 %v1312, 0.0
          %v1377 = vmax.f32 %v1313, 0.0
          %v1378 = vmax.f32 %v1314, 0.0
          %v1379 = vmax.f32 %v1315, 0.0
          %v1380 = vmax.f32 %v1316, 0.0
          %v1381 = vmax.f32 %v1317, 0.0
          %v1382 = vmax.f32 %v1318, 0.0
          %v1383 = vmax.f32 %v1319, 0.0
          %v1384 = vmax.f32 %v1320, 0.0
          %v1385 = vmax.f32 %v1321, 0.0
          %v1386 = vmax.f32 %v1322, 0.0
          %v1387 = vmax.f32 %v1323, 0.0
          %v1388 = vmax.f32 %v1324, 0.0
          %v1389 = vmax.f32 %v1325, 0.0
          %v1390 = vmax.f32 %v1326, 0.0
          %v1391 = vmax.f32 %v1327, 0.0
          %v1392 = vmax.f32 %v1328, 0.0
          %v1393 = vmax.f32 %v1329, 0.0
          %v1394 = vmax.f32 %v1330, 0.0
          %v1395 = vmax.f32 %v1331, 0.0
          %v1396 = vmax.f32 %v1332, 0.0
          %v1397 = vmax.f32 %v1333, 0.0
          %v1398 = vmax.f32 %v1334, 0.0
          %v1399 = vmax.f32 %v1335, 0.0
          %v1400 = vmax.f32 %v1336, 0.0
          %v1401 = vmax.f32 %v1337, 0.0
          %v1402 = vmax.f32 %v1338, 0.0
          %v1403 = vmax.f32 %v1339, 0.0
          %v1404 = vmax.f32 %v1340, 0.0
          %v1405 = vmax.f32 %v1341, 0.0
          %v1406 = vmax.f32 %v1342, 0.0
          %v1407 = vmax.f32 %v1343, 0.0
          %v1408 = vmax.f32 %v1344, 0.0
          %v1409 = vmax.f32 %v1345, 0.0
          %v1410 = vmax.f32 %v1346, 0.0
          %v1411 = vmax.f32 %v1347, 0.0
          %v1412 = vmax.f32 %v1348, 0.0
          %v1413 = vmax.f32 %v1349, 0.0
          %v1414 = vmax.f32 %v1350, 0.0
          %v1415 = vmax.f32 %v1351, 0.0
          %v1416 = vmax.f32 %v1352, 0.0
          %v1417 = vmax.f32 %v1353, 0.0
          %v1418 = vmax.f32 %v1354, 0.0
          %v1419 = vmax.f32 %v1355, 0.0
          %v1420 = vmax.f32 %v1356, 0.0
          %v1421 = vmax.f32 %v1357, 0.0
          %v1422 = vmax.f32 %v1358, 0.0
          %v1423 = vmax.f32 %v1359, 0.0
          %v1424 = vmax.f32 %v1360, 0.0
          %v1425 = vmax.f32 %v1361, 0.0
          %v1426 = vmax.f32 %v1362, 0.0
          %v1427 = vmax.f32 %v1363, 0.0
          %v1428 = vmax.f32 %v1364, 0.0
          %v1429 = vmax.f32 %v1365, 0.0
          %v1430 = vmax.f32 %v1366, 0.0
          %v1431 = vmax.f32 %v1367, 0.0
          %v1432 = vmax.f32 %v1368, 0.0
          %v1433 = vmax.f32 %v1369, 0.0
          %v1434 = vmax.f32 %v1370, 0.0
          %1435 = vst [vmem:[%s266] sm:$0xff] %v1371
          %1436 = vst [vmem:[%s266 + $0x8] sm:$0xff] %v1372
          %1437 = vst [vmem:[%s266 + $0x10] sm:$0xff] %v1373
          %1438 = vst [vmem:[%s266 + $0x18] sm:$0xff] %v1374
          %1439 = vst [vmem:[%s266 + $0x20] sm:$0xff] %v1375
          %1440 = vst [vmem:[%s266 + $0x28] sm:$0xff] %v1376
          %1441 = vst [vmem:[%s266 + $0x30] sm:$0xff] %v1377
          %1442 = vst [vmem:[%s266 + $0x38] sm:$0xff] %v1378
          %1443 = vst [vmem:[%s266 + $0x40] sm:$0xff] %v1379
          %1444 = vst [vmem:[%s266 + $0x48] sm:$0xff] %v1380
          %1445 = vst [vmem:[%s266 + $0x50] sm:$0xff] %v1381
          %1446 = vst [vmem:[%s266 + $0x58] sm:$0xff] %v1382
          %1447 = vst [vmem:[%s266 + $0x60] sm:$0xff] %v1383
          %1448 = vst [vmem:[%s266 + $0x68] sm:$0xff] %v1384
          %1449 = vst [vmem:[%s266 + $0x70] sm:$0xff] %v1385
          %1450 = vst [vmem:[%s266 + $0x78] sm:$0xff] %v1386
          %1451 = vst [vmem:[%s266 + $0x80] sm:$0xff] %v1387
          %1452 = vst [vmem:[%s266 + $0x88] sm:$0xff] %v1388
          %1453 = vst [vmem:[%s266 + $0x90] sm:$0xff] %v1389
          %1454 = vst [vmem:[%s266 + $0x98] sm:$0xff] %v1390
          %1455 = vst [vmem:[%s266 + $0xa0] sm:$0xff] %v1391
          %1456 = vst [vmem:[%s266 + $0xa8] sm:$0xff] %v1392
          %1457 = vst [vmem:[%s266 + $0xb0] sm:$0xff] %v1393
          %1458 = vst [vmem:[%s266 + $0xb8] sm:$0xff] %v1394
          %1459 = vst [vmem:[%s266 + $0xc0] sm:$0xff] %v1395
          %1460 = vst [vmem:[%s266 + $0xc8] sm:$0xff] %v1396
          %1461 = vst [vmem:[%s266 + $0xd0] sm:$0xff] %v1397
          %1462 = vst [vmem:[%s266 + $0xd8] sm:$0xff] %v1398
          %1463 = vst [vmem:[%s266 + $0xe0] sm:$0xff] %v1399
          %1464 = vst [vmem:[%s266 + $0xe8] sm:$0xff] %v1400
          %1465 = vst [vmem:[%s266 + $0xf0] sm:$0xff] %v1401
          %1466 = vst [vmem:[%s266 + $0xf8] sm:$0xff] %v1402
          %1467 = vst [vmem:[%s266 + $0x100] sm:$0xff] %v1403
          %1468 = vst [vmem:[%s266 + $0x108] sm:$0xff] %v1404
          %1469 = vst [vmem:[%s266 + $0x110] sm:$0xff] %v1405
          %1470 = vst [vmem:[%s266 + $0x118] sm:$0xff] %v1406
          %1471 = vst [vmem:[%s266 + $0x120] sm:$0xff] %v1407
          %1472 = vst [vmem:[%s266 + $0x128] sm:$0xff] %v1408
          %1473 = vst [vmem:[%s266 + $0x130] sm:$0xff] %v1409
          %1474 = vst [vmem:[%s266 + $0x138] sm:$0xff] %v1410
          %1475 = vst [vmem:[%s266 + $0x140] sm:$0xff] %v1411
          %1476 = vst [vmem:[%s266 + $0x148] sm:$0xff] %v1412
          %1477 = vst [vmem:[%s266 + $0x150] sm:$0xff] %v1413
          %1478 = vst [vmem:[%s266 + $0x158] sm:$0xff] %v1414
          %1479 = vst [vmem:[%s266 + $0x160] sm:$0xff] %v1415
          %1480 = vst [vmem:[%s266 + $0x168] sm:$0xff] %v1416
          %1481 = vst [vmem:[%s266 + $0x170] sm:$0xff] %v1417
          %1482 = vst [vmem:[%s266 + $0x178] sm:$0xff] %v1418
          %1483 = vst [vmem:[%s266 + $0x180] sm:$0xff] %v1419
          %1484 = vst [vmem:[%s266 + $0x188] sm:$0xff] %v1420
          %1485 = vst [vmem:[%s266 + $0x190] sm:$0xff] %v1421
          %1486 = vst [vmem:[%s266 + $0x198] sm:$0xff] %v1422
          %1487 = vst [vmem:[%s266 + $0x1a0] sm:$0xff] %v1423
          %1488 = vst [vmem:[%s266 + $0x1a8] sm:$0xff] %v1424
          %1489 = vst [vmem:[%s266 + $0x1b0] sm:$0xff] %v1425
          %1490 = vst [vmem:[%s266 + $0x1b8] sm:$0xff] %v1426
          %1491 = vst [vmem:[%s266 + $0x1c0] sm:$0xff] %v1427
          %1492 = vst [vmem:[%s266 + $0x1c8] sm:$0xff] %v1428
          %1493 = vst [vmem:[%s266 + $0x1d0] sm:$0xff] %v1429
          %1494 = vst [vmem:[%s266 + $0x1d8] sm:$0xff] %v1430
          %1495 = vst [vmem:[%s266 + $0x1e0] sm:$0xff] %v1431
          %1496 = vst [vmem:[%s266 + $0x1e8] sm:$0xff] %v1432
          %1497 = vst [vmem:[%s266 + $0x1f0] sm:$0xff] %v1433
          %1498 = vst [vmem:[%s266 + $0x1f8] sm:$0xff] %v1434
        $region44: #{_conv_impl.1} parent=35 // pred_fallthru
          _
        %s1499 = sand.u32 %s155, 1
        %s1500 = scalar_lea.sflag [#allocation4], %s1499
        %s1501 = sand.u32 %s155, 1
        %s1502 = smul.addr %s1501, 512
        %s1503 = scalar_lea.vmem [#allocation3], %s1502
        // Predicated region
        $region45: #{_conv_impl.1} parent=35 // pred_check
          %p1504 = pneg %p165
        $region46: #{_conv_impl.1} parent=35 // pred_check_branch
          %1506 = sbr.rel (%p1504) target = $region48
        $region47: #{_conv_impl.1} parent=35 // pred_region
          %s1507 = smul.u32 64, %s23
          %s1509 = ssub.s32 8192, 8192
          %1510 = vsyncadd %s1500, %s1509
          %s1511 = sadd.s32 %s24, %s1507
          %s1512 = smul.addr %s1511, 128
          %s1513 = scalar_lea.hbm %s4, %s1512
          %s1514 = sshll.u32 %s1503, 4
          %s1515 = int_to_ptr.vmem [resolvable:$true] %s1514
          %1520 = dma.vmem_to_hbm [thread:$0]  %s1515, 8192, %s1513, %s1500, 128, 128, 8
        $region48: #{_conv_impl.1} parent=35 // pred_fallthru
          _
      $region36: #{_conv_impl.1} parent=5 // pred_fallthru
        _
      %p1521 = scmp.le.s32.totalorder 2, %s13
      // Predicated region
      $region49: #{_conv_impl.1} parent=5 // pred_check
        %p1522 = pneg %p1521
      $region50: #{_conv_impl.1} parent=5 // pred_check_branch
        %1524 = sbr.rel (%p1522) target = $region52
      $region51: #{_conv_impl.1} parent=5 // pred_region
        %s1525 = ssub.s32 %s13, 2
        // Predicated region
        $region53: #{_conv_impl.1} parent=51 // pred_check
          %p1526 = pneg %p171
        $region54: #{_conv_impl.1} parent=51 // pred_check_branch
          %1528 = sbr.rel (%p1526) target = $region56
        $region55: #{_conv_impl.1} parent=51 // pred_region
          %s1529 = sand.u32 %s156, 1
          %s1530 = scalar_lea.sflag [#allocation4], %s1529
          %s1531 = sand.u32 %s156, 1
          %s1532 = smul.addr %s1531, 512
          %s1533 = scalar_lea.vmem [#allocation3], %s1532
          %1534 = dma.done %s1530, 8192
        $region56: #{_conv_impl.1} parent=51 // pred_fallthru
          _
      $region52: #{_conv_impl.1} parent=5 // pred_fallthru
        _
    $region6: #{_conv_impl.1} parent=1 // loop_footer
      %s17 = sadd.s32 1, %s13
    $region7: #{_conv_impl.1} parent=1 // loop_footer_branch
      %12 = sbr.rel target = $region3
    $region8: #{_conv_impl.1} parent=1 // loop_exit
      _
    %1535 = vsyncpa [#allocation4], 1
    %s1536 = scalar_lea.sflag [#allocation4], 1
    %1537 = vsyncpa %s1536, 1

</llo_original>
